<compile_context>
chip_gen: v7x
topology: tpu7x:2x2x1
jax: 0.10.0
libtpu: 0.0.40
codegen_flags: <defaults>
</compile_context>

<pallas_src>
import math

import numpy as np
import jax
import jax.numpy as jnp
from jax import lax
from jax.experimental import pallas as pl
from jax.experimental.pallas import tpu as pltpu

EPS = 1e-8          # eps of the `norm` / `_norm_no_nan` helpers (GVP internals)
LN_EPS_V = 1e-4     # LayerNorm(dims, eps=0.0001) -> vector-branch eps
LN_EPS_S = 1e-5     # nn.LayerNorm default eps    -> scalar-branch eps


def _round_up(x, m):
    return ((x + m - 1) // m) * m


def _detect_num_cores():
    """TensorCores per chip: 2 on megacore / dual-TC chips (v4, v5p, v7x), else 1."""
    try:
        kind = jax.devices()[0].device_kind.lower()
    except Exception:
        return 1
    if any(tag in kind for tag in ("v4", "v5p", "v7", "7x")):
        return 2
    return 1


def _choose_grid(n, row_tile, num_cores):
    """Token tile (lane axis, multiple of 128) and grid-step count.

    Single step on single-TC chips when everything fits in one tile; on multi-TC
    chips keep the step count a multiple of num_cores so 'parallel' shards evenly.
    """
    n128 = _round_up(max(n, 1), 128)
    t = max(128, min(_round_up(row_tile, 128), n128))
    steps = -(-n128 // t)
    if num_cores > 1 and n128 >= 128 * num_cores:
        steps = num_cores * (-(-steps // num_cores))
        t = max(128, _round_up(-(-n128 // steps), 128))
        steps = -(-n128 // t)
        if steps % num_cores:
            steps = num_cores * (-(-steps // num_cores))
    return t, steps


# ----------------------------------------------------------------------------
# Pallas kernel: fused GVP(activations=(None, None)) + GVP-LayerNorm
# (+ optional embed_confidence Linear added to the scalar output, node branch)
#
# Layout: tokens on lanes, channels on sublanes.  The single input block is
#   rows [0:SIp)              scalar features (zero-padded to a multiple of 8)
#   rows [SIp:SIp+CF)         rbf(confidence) (node branch only)
#   rows [SIp+CF:+3*VIp)      vector features, xyz-major / channel-minor
# The single output block is
#   rows [0:SO)               scalar output (SO never padded: LN reduces over it)
#   rows [SO:SO+3*VOp)        vector output, xyz-major / channel-minor
# ----------------------------------------------------------------------------
def _make_gvp_ln_kernel(sip, cf, vip, hp, vop, so, with_conf):
    def kernel(*refs):
        if with_conf:
            x_ref, whT_ref, wssT_ref, wsvT_ref, wvT_ref, wcT_ref, gbb_ref, out_ref = refs
        else:
            x_ref, whT_ref, wssT_ref, wsvT_ref, wvT_ref, gbb_ref, out_ref = refs

        voff = sip + cf
        s = x_ref[0:sip, :]                         # (SIp, T)
        v = x_ref[voff:voff + 3 * vip, :]           # (3*VIp, T)

        # ---- GVP: vh = Wh^T v  (one block-diagonal MXU matmul over all xyz) ----
        vh = jnp.dot(whT_ref[...], v, preferred_element_type=jnp.float32)   # (3*Hp, T)
        vn2 = (vh[0:hp] * vh[0:hp]
               + vh[hp:2 * hp] * vh[hp:2 * hp]
               + vh[2 * hp:3 * hp] * vh[2 * hp:3 * hp])
        vn = jnp.sqrt(jnp.maximum(vn2, EPS))                                 # (Hp, T)

        # ws(cat([s, vn])) == Wss.T @ s + Wsv.T @ vn + bs
        s_gvp = (jnp.dot(wssT_ref[...], s, preferred_element_type=jnp.float32)
                 + jnp.dot(wsvT_ref[...], vn, preferred_element_type=jnp.float32)
                 + gbb_ref[:, 0:1])                                          # (SO, T)

        # wv(vh) (one block-diagonal MXU matmul over all xyz)
        vg = jnp.dot(wvT_ref[...], vh, preferred_element_type=jnp.float32)   # (3*VOp, T)

        # ---- GVP LayerNorm, vector branch ----
        vsq = (vg[0:vop] * vg[0:vop]
               + vg[vop:2 * vop] * vg[vop:2 * vop]
               + vg[2 * vop:3 * vop] * vg[2 * vop:3 * vop])                  # (VOp, T)
        vsq = jnp.maximum(vsq, LN_EPS_V)
        nz = (vsq > 2.0 * LN_EPS_V).astype(jnp.float32)
        num = jnp.sum(vsq * nz, axis=0, keepdims=True)                       # (1, T)
        den = LN_EPS_V + jnp.sum(nz, axis=0, keepdims=True)
        vinv = nz * lax.rsqrt(num / den + LN_EPS_V)                          # (VOp, T)

        # ---- GVP LayerNorm, scalar branch (nn.LayerNorm over SO) ----
        mu = jnp.mean(s_gvp, axis=0, keepdims=True)                          # (1, T)
        var = jnp.mean(jnp.square(s_gvp - mu), axis=0, keepdims=True)
        s_ln = ((s_gvp - mu) * lax.rsqrt(var + LN_EPS_S)) * gbb_ref[:, 1:2] \
               + gbb_ref[:, 2:3]

        if with_conf:
            # embed_confidence is added AFTER LayerNorm in the reference; its bias
            # is folded into gbb[:, 2] (LN beta) by the wrapper.
            conf = x_ref[sip:sip + cf, :]
            s_ln = s_ln + jnp.dot(wcT_ref[...], conf,
                                  preferred_element_type=jnp.float32)

        out_ref[0:so, :] = s_ln
        out_ref[so:so + vop, :] = vg[0:vop] * vinv
        out_ref[so + vop:so + 2 * vop, :] = vg[vop:2 * vop] * vinv
        out_ref[so + 2 * vop:so + 3 * vop, :] = vg[2 * vop:3 * vop] * vinv

    return kernel


def _pack_gvp_weights(weights, with_conf):
    """Repack GVP + LayerNorm (+ confidence) params into the kernel layout.

    Small channel dims (SI, VI, H, VO) are zero-padded to multiples of 8; the
    vector weights are laid out block-diagonally over xyz so each vector
    projection is a single MXU matmul.  All padding is mathematically inert
    (zero weight rows/cols, padded VO channels fail the nonzero mask).
    SO is NEVER padded: the scalar LayerNorm reduces over axis 0 of the block.
    """
    wh, wss, wsv, bs, wvT, g, b = weights[:7]
    vi, h = wh.shape
    vo = wvT.shape[0]
    si, so = wss.shape
    vip, hp, vop, sip = _round_up(vi, 8), _round_up(h, 8), _round_up(vo, 8), _round_up(si, 8)

    whT_bd = jnp.zeros((3 * hp, 3 * vip), jnp.float32)
    wvT_bd = jnp.zeros((3 * vop, 3 * hp), jnp.float32)
    for ax in range(3):
        whT_bd = whT_bd.at[ax * hp:ax * hp + h, ax * vip:ax * vip + vi].set(wh.T)
        wvT_bd = wvT_bd.at[ax * vop:ax * vop + vo, ax * hp:ax * hp + h].set(wvT)
    wssT_p = jnp.zeros((so, sip), jnp.float32).at[:, :si].set(wss.T)
    wsvT_p = jnp.zeros((so, hp), jnp.float32).at[:, :h].set(wsv.T)

    beta = b
    packed = {"si": si, "sip": sip, "vi": vi, "vip": vip, "h": h, "hp": hp,
              "vo": vo, "vop": vop, "so": so, "with_conf": with_conf,
              "whT": whT_bd, "wssT": wssT_p, "wsvT": wsvT_p, "wvT": wvT_bd}
    if with_conf:
        wc, bc = weights[7], weights[8]
        packed["wcT"] = wc.T.astype(jnp.float32)           # (SO, 16)
        beta = b + bc                                      # fold conf bias into LN beta
    packed["gbb"] = jnp.concatenate([bs.T, g.T, beta.T], axis=1).astype(jnp.float32)
    assert packed["wssT"].shape[0] == so and packed["gbb"].shape[0] == so  # SO unpadded
    return packed


def gvp_layernorm_pallas(x_cm, packed, row_tile=4096, num_cores=None):
    """Fused GVP(activations=(None,None)) + LayerNorm (+ confidence Linear).

    x_cm: (C_in, N) channel-major packed input (scalars [+conf] + vectors).
    Returns the channel-major packed output (SO + 3*VOp, Np); the caller slices
    tokens [:N] and reshapes to the module's (N, SO)/(N, VO, 3) layout.
    """
    cin, N = x_cm.shape
    sip, vip, hp, vop, so = (packed["sip"], packed["vip"], packed["hp"],
                             packed["vop"], packed["so"])
    with_conf = packed["with_conf"]
    cf = 16 if with_conf else 0
    assert cin == sip + cf + 3 * vip
    cout = so + 3 * vop

    if num_cores is None:
        num_cores = _detect_num_cores()
    T, steps = _choose_grid(N, row_tile, num_cores)
    Np = T * steps
    x_p = jnp.pad(x_cm.astype(jnp.float32), ((0, 0), (0, Np - N)))

    wnames = ["whT", "wssT", "wsvT", "wvT"] + (["wcT"] if with_conf else []) + ["gbb"]
    weights = [packed[n] for n in wnames]

    in_specs = [pl.BlockSpec((cin, T), lambda i: (0, i))]
    in_specs += [pl.BlockSpec(w.shape, lambda i: (0, 0)) for w in weights]

    y = pl.pallas_call(
        _make_gvp_ln_kernel(sip, cf, vip, hp, vop, so, with_conf),
        grid=(steps,),
        in_specs=in_specs,
        out_specs=pl.BlockSpec((cout, T), lambda i: (0, i)),
        out_shape=jax.ShapeDtypeStruct((cout, Np), jnp.float32),
        compiler_params=pltpu.CompilerParams(dimension_semantics=("parallel",)),
    )(x_p, *weights)
    return y


def _unpack_outputs(y, packed, n):
    """Packed channel-major kernel output -> module layout (N, SO), (N, VO, 3)."""
    so, vo, vop = packed["so"], packed["vo"], packed["vop"]
    s_out = jnp.swapaxes(y[:so, :n], 0, 1)                                    # (N, SO)
    v_out = jnp.transpose(y[so:, :n].reshape(3, vop, n)[:, :vo], (2, 1, 0))   # (N, VO, 3)
    # TODO(synk): downstream GVP layers could consume the channel-major (C, N)
    # form directly and skip this final transpose pass.
    return s_out, v_out


# ----------------------------------------------------------------------------
# Plain-JAX glue reproducing the torch.no_grad() featurization.
# Built channel-major (channels leading, tokens trailing) so the kernel input
# is produced directly in its final layout (no separate transpose pass).
# ----------------------------------------------------------------------------
def _nan_to_num(x):
    return jnp.where(jnp.isfinite(x), x, jnp.zeros((), x.dtype))


def _norm(x, axis=-1, keepdims=False):
    return jnp.sqrt(jnp.sum(jnp.square(x), axis=axis, keepdims=keepdims) + EPS)


def _normalize(x, axis=-1):
    return _nan_to_num(x / _norm(x, axis=axis, keepdims=True))


def _rbf_cm(values, v_min, v_max, n_bins=16):
    centers = jnp.linspace(v_min, v_max, n_bins)
    std = (v_max - v_min) / n_bins
    z = (values[None, ...] - centers.reshape((n_bins,) + (1,) * values.ndim)) / std
    return jnp.exp(-(z ** 2))                       # (n_bins, *values.shape)


def _dihedral_angles(coords, eps=1e-7):
    B, L = coords.shape[0], coords.shape[1]
    X = coords[:, :, :3].reshape(B, 3 * L, 3)
    dX = X[:, 1:] - X[:, :-1]
    U = _normalize(dX, -1)
    u_2, u_1, u_0 = U[:, :-2], U[:, 1:-1], U[:, 2:]
    n_2 = _normalize(jnp.cross(u_2, u_1), -1)
    n_1 = _normalize(jnp.cross(u_1, u_0), -1)
    cosD = jnp.clip(jnp.sum(n_2 * n_1, -1), -1 + eps, 1 - eps)
    D = jnp.sign(jnp.sum(u_2 * n_1, -1)) * jnp.arccos(cosD)
    D = jnp.pad(D, ((0, 0), (1, 2)))
    return D.reshape(B, L, 3)


def _sidechains(coords):
    n, origin, c = coords[:, :, 0], coords[:, :, 1], coords[:, :, 2]
    c = _normalize(c - origin)
    n = _normalize(n - origin)
    bisector = _normalize(c + n)
    perp = _normalize(jnp.cross(c, n))
    return -bisector * math.sqrt(1 / 3) - perp * math.sqrt(2 / 3)


def get_node_features_cm(coords, coord_mask, confidence, vip):
    """Packed channel-major node input: rows = [dihedrals(6), mask(1), pad(1),
    rbf(confidence)(16), vectors xyz-major (3*vip)] ; shape (24 + 3*vip, B*L)."""
    B, L = coords.shape[:2]
    N = B * L
    D = _dihedral_angles(coords)                                  # (B, L, 3)
    Dm = jnp.moveaxis(D, -1, 0)                                   # (3, B, L)
    s_cm = jnp.concatenate(
        [jnp.cos(Dm), jnp.sin(Dm), coord_mask.astype(jnp.float32)[None]],
        axis=0).reshape(7, N)
    conf_cm = _rbf_cm(confidence, 0.0, 1.0, 16).reshape(16, N)

    Xca = coords[:, :, 1]
    fwd = jnp.pad(_normalize(Xca[:, 1:] - Xca[:, :-1]), ((0, 0), (0, 1), (0, 0)))
    bwd = jnp.pad(_normalize(Xca[:, :-1] - Xca[:, 1:]), ((0, 0), (1, 0), (0, 0)))
    side = _sidechains(coords)
    v = jnp.stack([fwd, bwd, side], axis=0)                       # (3chan, B, L, 3xyz)
    v = jnp.moveaxis(v, -1, 0)                                    # (3xyz, 3chan, B, L)
    v = jnp.pad(v, ((0, 0), (0, vip - 3), (0, 0), (0, 0))).reshape(3 * vip, N)

    return jnp.concatenate(
        [s_cm, jnp.zeros((1, N), jnp.float32), conf_cm, v], axis=0)


def _positional_embeddings_cm(edge_index, num_emb=16):
    d = (edge_index[0] - edge_index[1]).astype(jnp.float32)       # (B, E)
    freq = jnp.exp(jnp.arange(0, num_emb, 2, dtype=jnp.float32)
                   * -(math.log(10000.0) / num_emb))              # (num_emb//2,)
    angles = freq[:, None, None] * d[None]                        # (num_emb//2, B, E)
    return jnp.concatenate([jnp.cos(angles), jnp.sin(angles)], axis=0)


def _dist(Xca, coord_mask, padding_mask, top_k):
    B, L = Xca.shape[:2]
    cm2 = coord_mask[:, None, :] & coord_mask[:, :, None]
    rm = ~padding_mask
    rm2 = rm[:, None, :] & rm[:, :, None]
    dX = Xca[:, None, :, :] - Xca[:, :, None, :]
    D = cm2.astype(jnp.float32) * _norm(dX, axis=-1)
    seqpos = jnp.arange(L)
    Dseq = jnp.abs(seqpos[:, None] - seqpos[None, :]).astype(jnp.float32)[None]
    D_adj = (_nan_to_num(D)
             + (~cm2).astype(jnp.float32) * (1e8 + Dseq * 1e6)
             + (~rm2).astype(jnp.float32) * 1e10)
    if top_k == -1:
        D_nb = D_adj
        E_idx = jnp.broadcast_to(seqpos, D_nb.shape)
    else:
        k = min(top_k, L)
        neg_vals, E_idx = lax.top_k(-D_adj, k)
        D_nb = -neg_vals
    return D_nb, E_idx, D_nb < 5e7, D_nb < 5e9


def get_edge_features_cm(coords, coord_mask, padding_mask, top_k, vip):
    """Packed channel-major edge input: rows = [rbf(16), posemb(16), ~cm_src(1),
    ~cm_dest(1), pad(6), vectors xyz-major (3*vip)] ; plus edge_index (B, 2, L*k)."""
    B, L = coords.shape[:2]
    Xca = coords[:, :, 1]
    E_dist, E_idx, E_cmask, E_rmask = _dist(Xca, coord_mask, padding_mask, top_k)
    k = E_idx.shape[-1]
    Ne = B * L * k

    src = jnp.broadcast_to(jnp.arange(L)[None, :, None], (B, L, k))
    edge_index = jnp.stack([src, E_idx], axis=0).reshape(2, B, L * k)
    E_dist = E_dist.reshape(B, L * k)
    E_cmask = E_cmask.reshape(B, L * k)
    E_rmask = E_rmask.reshape(B, L * k)

    D_rbf = _rbf_cm(E_dist, 0.0, 20.0, 16)                        # (16, B, L*k)
    pos_emb = _positional_embeddings_cm(edge_index, 16)           # (16, B, L*k)

    dest = edge_index[1]
    X_src = jnp.broadcast_to(Xca[:, :, None, :], (B, L, k, 3)).reshape(B, L * k, 3)
    X_dest = jnp.take_along_axis(Xca, dest[..., None], axis=1)
    cm_src = jnp.broadcast_to(coord_mask[:, :, None], (B, L, k)).reshape(B, L * k)
    cm_dest = jnp.take_along_axis(coord_mask, dest, axis=1)

    E_vec = X_src - X_dest
    cmf = E_cmask.astype(jnp.float32)[..., None]
    E_vec_mean = jnp.sum(E_vec * cmf, axis=1, keepdims=True) / jnp.sum(cmf, axis=1, keepdims=True)
    E_vec = E_vec * cmf + E_vec_mean * (1.0 - cmf)
    E_vec_n = _nan_to_num(_normalize(E_vec))                      # (B, L*k, 3)

    edge_s_cm = jnp.concatenate(
        [_nan_to_num(D_rbf), _nan_to_num(pos_emb),
         (~cm_src).astype(jnp.float32)[None],
         (~cm_dest).astype(jnp.float32)[None]], axis=0).reshape(34, Ne)

    sip = _round_up(34, 8)
    ev_cm = jnp.moveaxis(E_vec_n, -1, 0).reshape(3, 1, Ne)
    ev_cm = jnp.pad(ev_cm, ((0, 0), (0, vip - 1), (0, 0))).reshape(3 * vip, Ne)
    x_edge = jnp.concatenate(
        [edge_s_cm, jnp.zeros((sip - 34, Ne), jnp.float32), ev_cm], axis=0)

    keep = E_rmask & E_cmask                 # remove_edges_without_coords=True
    edge_index = jnp.where(keep[None], edge_index, -1)
    return x_edge, jnp.transpose(edge_index, (1, 0, 2))           # (B, 2, L*k)


def flatten_graph(node_emb, edge_emb, edge_index, B, L):
    edge_mask = jnp.any(edge_index != -1, axis=1)                 # (B, L*k)
    ei = edge_index + (jnp.arange(B) * L)[:, None, None]
    ei = jnp.transpose(ei, (1, 0, 2)).reshape(2, -1)
    edge_mask = edge_mask.reshape(-1)
    # TODO(synk): the reference filters edges via boolean indexing (dynamic output
    # shape); here we keep all edges, set invalid ones to -1, and return the mask.
    ei = jnp.where(edge_mask[None, :], ei, -1)
    return node_emb, edge_emb, ei, edge_mask


# ----------------------------------------------------------------------------
# Full forward
# ----------------------------------------------------------------------------
def gvp_graph_embedding_forward(params, coords, coord_mask, padding_mask,
                                confidence, top_k, row_tile=4096):
    B, L = coords.shape[:2]
    node_pw = _pack_gvp_weights(params["node"], with_conf=True)
    edge_pw = _pack_gvp_weights(params["edge"], with_conf=False)

    x_node = get_node_features_cm(coords, coord_mask, confidence, node_pw["vip"])
    x_edge, edge_index = get_edge_features_cm(coords, coord_mask, padding_mask,
                                              top_k, edge_pw["vip"])
    Nn, Ne = B * L, x_edge.shape[1]

    yn = gvp_layernorm_pallas(x_node, node_pw, row_tile=row_tile)
    ye = gvp_layernorm_pallas(x_edge, edge_pw, row_tile=row_tile)

    n_s, n_v = _unpack_outputs(yn, node_pw, Nn)
    e_s, e_v = _unpack_outputs(ye, edge_pw, Ne)
    return flatten_graph((n_s, n_v), (e_s, e_v), edge_index, B, L)


# ----------------------------------------------------------------------------
# Pure-JAX reference of the fused path (GVP + LayerNorm + confidence Linear)
# ----------------------------------------------------------------------------
def _gvp_ln_reference(s, v3, weights, conf=None):
    wh, wss, wsv, bs, wvT, g, b = weights[:7]
    vt = jnp.swapaxes(v3, -1, -2)                                          # (N, 3, VI)
    vh = jnp.einsum('nxd,dh->nxh', vt, wh, precision='highest')            # (N, 3, H)
    vn = jnp.sqrt(jnp.maximum(jnp.sum(vh * vh, axis=-2), EPS))             # (N, H)
    s_gvp = (jnp.einsum('ni,io->no', s, wss, precision='highest')
             + jnp.einsum('nh,ho->no', vn, wsv, precision='highest') + bs)
    v_gvp = jnp.einsum('nxh,oh->nox', vh, wvT, precision='highest')        # (N, VO, 3)

    vn2 = jnp.maximum(jnp.sum(v_gvp * v_gvp, axis=-1, keepdims=True), LN_EPS_V)
    nz = (vn2 > 2.0 * LN_EPS_V).astype(jnp.float32)
    den = LN_EPS_V + jnp.sum(nz, axis=-2, keepdims=True)
    vscale = jnp.sqrt(jnp.sum(vn2 * nz, axis=-2, keepdims=True) / den + LN_EPS_V)
    v_out = nz * (v_gvp / vscale)

    mu = jnp.mean(s_gvp, -1, keepdims=True)
    var = jnp.mean((s_gvp - mu) ** 2, -1, keepdims=True)
    s_out = (s_gvp - mu) / jnp.sqrt(var + LN_EPS_S) * g + b
    if conf is not None:
        wc, bc = weights[7], weights[8]
        s_out = s_out + jnp.einsum('nj,jo->no', conf, wc, precision='highest') + bc
    return s_out, v_out


def init_params(key, hs_node=32, hv_node=8, hs_edge=16, hv_edge=1):
    ks = jax.random.split(key, 6)
    # node GVP: (si, vi) = (7, 3) -> (hs_node, hv_node); h_dim = max(vi, vo)
    h_n = max(3, hv_node)
    node = (
        jax.random.normal(ks[0], (3, h_n), jnp.float32) / math.sqrt(3),              # wh (in,out)
        jax.random.normal(ks[1], (7, hs_node), jnp.float32) / math.sqrt(7 + h_n),    # ws (scalar part)
        jax.random.normal(ks[2], (h_n, hs_node), jnp.float32) / math.sqrt(7 + h_n),  # ws (vn part)
        jnp.zeros((1, hs_node), jnp.float32),                                        # bs
        jax.random.normal(ks[3], (hv_node, h_n), jnp.float32) / math.sqrt(h_n),      # wv (out,in)
        jnp.ones((1, hs_node), jnp.float32),                                         # LN gamma
        jnp.zeros((1, hs_node), jnp.float32),                                        # LN beta
        jax.random.normal(ks[4], (16, hs_node), jnp.float32) / math.sqrt(16),        # embed_confidence W
        jnp.zeros((1, hs_node), jnp.float32),                                        # embed_confidence b
    )
    # edge GVP: (si, vi) = (34, 1) -> (hs_edge, hv_edge); h_dim = max(vi, vo)
    h_e = max(1, hv_edge)
    ke = jax.random.split(ks[5], 3)
    edge = (
        jax.random.normal(ke[0], (1, h_e), jnp.float32),
        jax.random.normal(ke[1], (34, hs_edge), jnp.float32) / math.sqrt(34 + h_e),
        jax.random.normal(ke[2], (h_e, hs_edge), jnp.float32) / math.sqrt(34 + h_e),
        jnp.zeros((1, hs_edge), jnp.float32),
        jax.random.normal(jax.random.fold_in(ke[2], 7), (hv_edge, h_e), jnp.float32),
        jnp.ones((1, hs_edge), jnp.float32),
        jnp.zeros((1, hs_edge), jnp.float32),
    )
    return {"node": node, "edge": edge}


if __name__ == "__main__":
    key = jax.random.PRNGKey(0)
    B, L = 2, 8
    TOP_K = 4
    HS_N, HV_N, HS_E, HV_E = 32, 8, 16, 1

    k1, k2, k3, kp = jax.random.split(key, 4)
    coords = jax.random.normal(k1, (B, L, 3, 3), dtype=jnp.float32) * 3.0
    coord_mask = jax.random.uniform(k2, (B, L)) > 0.1
    padding_mask = jnp.zeros((B, L), dtype=bool).at[1, L - 1].set(True)
    confidence = jax.random.uniform(k3, (B, L), dtype=jnp.float32)

    params = init_params(kp, HS_N, HV_N, HS_E, HV_E)

    fwd = jax.jit(gvp_graph_embedding_forward, static_argnames=("top_k", "row_tile"))
    node_emb, edge_emb, edge_index, edge_mask = fwd(
        params, coords, coord_mask, padding_mask, confidence, top_k=TOP_K)
    jax.block_until_ready((node_emb, edge_emb, edge_index, edge_mask))

    assert node_emb[0].shape == (B * L, HS_N)
    assert node_emb[1].shape == (B * L, HV_N, 3)
    assert edge_emb[0].shape == (B * L * TOP_K, HS_E)
    assert edge_emb[1].shape == (B * L * TOP_K, HV_E, 3)
    assert edge_index.shape == (2, B * L * TOP_K)

    # Correctness check of the fused Pallas path against a pure-JAX reference.
    node_pw = _pack_gvp_weights(params["node"], with_conf=True)
    edge_pw = _pack_gvp_weights(params["edge"], with_conf=False)
    x_node = get_node_features_cm(coords, coord_mask, confidence, node_pw["vip"])
    x_edge, _ = get_edge_features_cm(coords, coord_mask, padding_mask, TOP_K,
                                     edge_pw["vip"])
    Nn, Ne = B * L, x_edge.shape[1]

    sipn = node_pw["sip"]
    ns = jnp.swapaxes(x_node[:7], 0, 1)                                      # (Nn, 7)
    conf_rbf = jnp.swapaxes(x_node[sipn:sipn + 16], 0, 1)                    # (Nn, 16)
    nv = jnp.transpose(x_node[sipn + 16:].reshape(3, node_pw["vip"], Nn)[:, :3],
                       (2, 1, 0))                                            # (Nn, 3, 3)
    sipe = edge_pw["sip"]
    es = jnp.swapaxes(x_edge[:34], 0, 1)                                     # (Ne, 34)
    ev = jnp.transpose(x_edge[sipe:].reshape(3, edge_pw["vip"], Ne)[:, :1],
                       (2, 1, 0))                                            # (Ne, 1, 3)

    ref_ns, ref_nv = _gvp_ln_reference(ns, nv, params["node"], conf_rbf)
    ref_es, ref_ev = _gvp_ln_reference(es, ev, params["edge"], None)

    np.testing.assert_allclose(np.asarray(node_emb[0]), np.asarray(ref_ns), rtol=2e-3, atol=2e-3)
    np.testing.assert_allclose(np.asarray(node_emb[1]), np.asarray(ref_nv), rtol=2e-3, atol=2e-3)
    np.testing.assert_allclose(np.asarray(edge_emb[0]), np.asarray(ref_es), rtol=2e-3, atol=2e-3)
    np.testing.assert_allclose(np.asarray(edge_emb[1]), np.asarray(ref_ev), rtol=2e-3, atol=2e-3)

    print("KERNEL_OK")
</pallas_src>

<mosaic_0001>
module attributes {stable_mosaic.version = 11 : i64} {
  func.func @kernel(%arg0: i32, %arg1: memref<48x128xf32, #tpu.memory_space<vmem>>, %arg2: memref<24x24xf32, #tpu.memory_space<vmem>>, %arg3: memref<32x8xf32, #tpu.memory_space<vmem>>, %arg4: memref<32x8xf32, #tpu.memory_space<vmem>>, %arg5: memref<24x24xf32, #tpu.memory_space<vmem>>, %arg6: memref<32x16xf32, #tpu.memory_space<vmem>>, %arg7: memref<32x3xf32, #tpu.memory_space<vmem>>, %arg8: memref<56x128xf32, #tpu.memory_space<vmem>>) attributes {dimension_semantics = [#tpu.dimension_semantics<parallel>], iteration_bounds = array<i64: 1>, scalar_prefetch = 0 : i64, scratch_operands = 0 : i64, tpu.core_type = #tpu.core_type<tc>, window_params = [{transform_indices = @transform_0, window_bounds = array<i64: 48, 128>}, {pipeline_mode = #tpu.pipeline_mode<synchronous>, transform_indices = @transform_1, window_bounds = array<i64: 24, 24>}, {pipeline_mode = #tpu.pipeline_mode<synchronous>, transform_indices = @transform_2, window_bounds = array<i64: 32, 8>}, {pipeline_mode = #tpu.pipeline_mode<synchronous>, transform_indices = @transform_3, window_bounds = array<i64: 32, 8>}, {pipeline_mode = #tpu.pipeline_mode<synchronous>, transform_indices = @transform_4, window_bounds = array<i64: 24, 24>}, {pipeline_mode = #tpu.pipeline_mode<synchronous>, transform_indices = @transform_5, window_bounds = array<i64: 32, 16>}, {pipeline_mode = #tpu.pipeline_mode<synchronous>, transform_indices = @transform_6, window_bounds = array<i64: 32, 3>}, {transform_indices = @transform_7, window_bounds = array<i64: 56, 128>}]} {
    %c0 = arith.constant 0 : index
    %c0_0 = arith.constant 0 : index
    %0 = vector.load %arg1[%c0, %c0_0] : memref<48x128xf32, #tpu.memory_space<vmem>>, vector<8x128xf32>
    %c24 = arith.constant 24 : index
    %c0_1 = arith.constant 0 : index
    %1 = vector.load %arg1[%c24, %c0_1] : memref<48x128xf32, #tpu.memory_space<vmem>>, vector<24x128xf32>
    %c0_2 = arith.constant 0 : index
    %c0_3 = arith.constant 0 : index
    %2 = vector.load %arg2[%c0_2, %c0_3] : memref<24x24xf32, #tpu.memory_space<vmem>>, vector<24x24xf32>
    %cst = arith.constant dense<0.000000e+00> : vector<24x128xf32>
    %3 = tpu.matmul %2, %1, %cst {dimension_numbers = #tpu.dot_dimension_numbers<[1], [0], [0], [1], [0, 0, 1, 1], [], []>} : vector<24x24xf32>, vector<24x128xf32>, vector<24x128xf32> -> vector<24x128xf32>
    %4 = vector.extract_strided_slice %3 {offsets = [0, 0], sizes = [8, 128], strides = [1, 1]} : vector<24x128xf32> to vector<8x128xf32>
    %5 = vector.extract_strided_slice %3 {offsets = [0, 0], sizes = [8, 128], strides = [1, 1]} : vector<24x128xf32> to vector<8x128xf32>
    %6 = arith.mulf %4, %5 : vector<8x128xf32>
    %7 = vector.extract_strided_slice %3 {offsets = [8, 0], sizes = [8, 128], strides = [1, 1]} : vector<24x128xf32> to vector<8x128xf32>
    %8 = vector.extract_strided_slice %3 {offsets = [8, 0], sizes = [8, 128], strides = [1, 1]} : vector<24x128xf32> to vector<8x128xf32>
    %9 = arith.mulf %7, %8 : vector<8x128xf32>
    %10 = arith.addf %6, %9 : vector<8x128xf32>
    %11 = vector.extract_strided_slice %3 {offsets = [16, 0], sizes = [8, 128], strides = [1, 1]} : vector<24x128xf32> to vector<8x128xf32>
    %12 = vector.extract_strided_slice %3 {offsets = [16, 0], sizes = [8, 128], strides = [1, 1]} : vector<24x128xf32> to vector<8x128xf32>
    %13 = arith.mulf %11, %12 : vector<8x128xf32>
    %14 = arith.addf %10, %13 : vector<8x128xf32>
    %cst_4 = arith.constant 9.99999993E-9 : f32
    %15 = vector.broadcast %cst_4 : f32 to vector<8x128xf32>
    %16 = arith.maximumf %14, %15 : vector<8x128xf32>
    %17 = math.sqrt %16 : vector<8x128xf32>
    %c0_5 = arith.constant 0 : index
    %c0_6 = arith.constant 0 : index
    %18 = vector.load %arg3[%c0_5, %c0_6] : memref<32x8xf32, #tpu.memory_space<vmem>>, vector<32x8xf32>
    %cst_7 = arith.constant dense<0.000000e+00> : vector<32x128xf32>
    %19 = tpu.matmul %18, %0, %cst_7 {dimension_numbers = #tpu.dot_dimension_numbers<[1], [0], [0], [1], [0, 0, 1, 1], [], []>} : vector<32x8xf32>, vector<8x128xf32>, vector<32x128xf32> -> vector<32x128xf32>
    %c0_8 = arith.constant 0 : index
    %c0_9 = arith.constant 0 : index
    %20 = vector.load %arg4[%c0_8, %c0_9] : memref<32x8xf32, #tpu.memory_space<vmem>>, vector<32x8xf32>
    %cst_10 = arith.constant dense<0.000000e+00> : vector<32x128xf32>
    %21 = tpu.matmul %20, %17, %cst_10 {dimension_numbers = #tpu.dot_dimension_numbers<[1], [0], [0], [1], [0, 0, 1, 1], [], []>} : vector<32x8xf32>, vector<8x128xf32>, vector<32x128xf32> -> vector<32x128xf32>
    %22 = arith.addf %19, %21 : vector<32x128xf32>
    %c0_11 = arith.constant 0 : index
    %c0_12 = arith.constant 0 : index
    %23 = vector.load %arg7[%c0_11, %c0_12] : memref<32x3xf32, #tpu.memory_space<vmem>>, vector<32x1xf32>
    %24 = vector.broadcast %23 : vector<32x1xf32> to vector<32x128xf32>
    %25 = arith.addf %22, %24 : vector<32x128xf32>
    %c0_13 = arith.constant 0 : index
    %c0_14 = arith.constant 0 : index
    %26 = vector.load %arg5[%c0_13, %c0_14] : memref<24x24xf32, #tpu.memory_space<vmem>>, vector<24x24xf32>
    %cst_15 = arith.constant dense<0.000000e+00> : vector<24x128xf32>
    %27 = tpu.matmul %26, %3, %cst_15 {dimension_numbers = #tpu.dot_dimension_numbers<[1], [0], [0], [1], [0, 0, 1, 1], [], []>} : vector<24x24xf32>, vector<24x128xf32>, vector<24x128xf32> -> vector<24x128xf32>
    %28 = vector.extract_strided_slice %27 {offsets = [0, 0], sizes = [8, 128], strides = [1, 1]} : vector<24x128xf32> to vector<8x128xf32>
    %29 = vector.extract_strided_slice %27 {offsets = [0, 0], sizes = [8, 128], strides = [1, 1]} : vector<24x128xf32> to vector<8x128xf32>
    %30 = arith.mulf %28, %29 : vector<8x128xf32>
    %31 = vector.extract_strided_slice %27 {offsets = [8, 0], sizes = [8, 128], strides = [1, 1]} : vector<24x128xf32> to vector<8x128xf32>
    %32 = vector.extract_strided_slice %27 {offsets = [8, 0], sizes = [8, 128], strides = [1, 1]} : vector<24x128xf32> to vector<8x128xf32>
    %33 = arith.mulf %31, %32 : vector<8x128xf32>
    %34 = arith.addf %30, %33 : vector<8x128xf32>
    %35 = vector.extract_strided_slice %27 {offsets = [16, 0], sizes = [8, 128], strides = [1, 1]} : vector<24x128xf32> to vector<8x128xf32>
    %36 = vector.extract_strided_slice %27 {offsets = [16, 0], sizes = [8, 128], strides = [1, 1]} : vector<24x128xf32> to vector<8x128xf32>
    %37 = arith.mulf %35, %36 : vector<8x128xf32>
    %38 = arith.addf %34, %37 : vector<8x128xf32>
    %cst_16 = arith.constant 9.99999974E-5 : f32
    %39 = vector.broadcast %cst_16 : f32 to vector<8x128xf32>
    %40 = arith.maximumf %38, %39 : vector<8x128xf32>
    %cst_17 = arith.constant 2.000000e-04 : f32
    %41 = vector.broadcast %cst_17 : f32 to vector<8x128xf32>
    %42 = arith.cmpf ogt, %40, %41 : vector<8x128xf32>
    %43 = arith.extui %42 : vector<8x128xi1> to vector<8x128xi32>
    %44 = arith.sitofp %43 : vector<8x128xi32> to vector<8x128xf32>
    %45 = arith.mulf %40, %44 : vector<8x128xf32>
    %cst_18 = arith.constant dense<0.000000e+00> : vector<128xf32>
    %46 = vector.multi_reduction <add>, %45, %cst_18 [0] : vector<8x128xf32> to vector<128xf32>
    %47 = vector.shape_cast %46 : vector<128xf32> to vector<1x128xf32>
    %cst_19 = arith.constant dense<0.000000e+00> : vector<128xf32>
    %48 = vector.multi_reduction <add>, %44, %cst_19 [0] : vector<8x128xf32> to vector<128xf32>
    %49 = vector.shape_cast %48 : vector<128xf32> to vector<1x128xf32>
    %cst_20 = arith.constant 9.99999974E-5 : f32
    %50 = vector.broadcast %cst_20 : f32 to vector<1x128xf32>
    %51 = arith.addf %50, %49 : vector<1x128xf32>
    %52 = arith.divf %47, %51 : vector<1x128xf32>
    %cst_21 = arith.constant 9.99999974E-5 : f32
    %53 = vector.broadcast %cst_21 : f32 to vector<1x128xf32>
    %54 = arith.addf %52, %53 : vector<1x128xf32>
    %55 = math.rsqrt %54 : vector<1x128xf32>
    %56 = vector.broadcast %55 : vector<1x128xf32> to vector<8x128xf32>
    %57 = arith.mulf %44, %56 : vector<8x128xf32>
    %cst_22 = arith.constant dense<0.000000e+00> : vector<128xf32>
    %58 = vector.multi_reduction <add>, %25, %cst_22 [0] : vector<32x128xf32> to vector<128xf32>
    %59 = vector.shape_cast %58 : vector<128xf32> to vector<1x128xf32>
    %cst_23 = arith.constant 3.200000e+01 : f32
    %60 = vector.broadcast %cst_23 : f32 to vector<1x128xf32>
    %61 = arith.divf %59, %60 : vector<1x128xf32>
    %62 = vector.broadcast %61 : vector<1x128xf32> to vector<32x128xf32>
    %63 = arith.subf %25, %62 : vector<32x128xf32>
    %64 = arith.mulf %63, %63 : vector<32x128xf32>
    %cst_24 = arith.constant dense<0.000000e+00> : vector<128xf32>
    %65 = vector.multi_reduction <add>, %64, %cst_24 [0] : vector<32x128xf32> to vector<128xf32>
    %66 = vector.shape_cast %65 : vector<128xf32> to vector<1x128xf32>
    %cst_25 = arith.constant 3.200000e+01 : f32
    %67 = vector.broadcast %cst_25 : f32 to vector<1x128xf32>
    %68 = arith.divf %66, %67 : vector<1x128xf32>
    %69 = vector.broadcast %61 : vector<1x128xf32> to vector<32x128xf32>
    %70 = arith.subf %25, %69 : vector<32x128xf32>
    %cst_26 = arith.constant 9.99999974E-6 : f32
    %71 = vector.broadcast %cst_26 : f32 to vector<1x128xf32>
    %72 = arith.addf %68, %71 : vector<1x128xf32>
    %73 = math.rsqrt %72 : vector<1x128xf32>
    %74 = vector.broadcast %73 : vector<1x128xf32> to vector<32x128xf32>
    %75 = arith.mulf %70, %74 : vector<32x128xf32>
    %c0_27 = arith.constant 0 : index
    %c1 = arith.constant 1 : index
    %76 = vector.load %arg7[%c0_27, %c1] : memref<32x3xf32, #tpu.memory_space<vmem>>, vector<32x1xf32>
    %77 = vector.broadcast %76 : vector<32x1xf32> to vector<32x128xf32>
    %78 = arith.mulf %75, %77 : vector<32x128xf32>
    %c0_28 = arith.constant 0 : index
    %c2 = arith.constant 2 : index
    %79 = vector.load %arg7[%c0_28, %c2] : memref<32x3xf32, #tpu.memory_space<vmem>>, vector<32x1xf32>
    %80 = vector.broadcast %79 : vector<32x1xf32> to vector<32x128xf32>
    %81 = arith.addf %78, %80 : vector<32x128xf32>
    %c8 = arith.constant 8 : index
    %c0_29 = arith.constant 0 : index
    %82 = vector.load %arg1[%c8, %c0_29] : memref<48x128xf32, #tpu.memory_space<vmem>>, vector<16x128xf32>
    %c0_30 = arith.constant 0 : index
    %c0_31 = arith.constant 0 : index
    %83 = vector.load %arg6[%c0_30, %c0_31] : memref<32x16xf32, #tpu.memory_space<vmem>>, vector<32x16xf32>
    %cst_32 = arith.constant dense<0.000000e+00> : vector<32x128xf32>
    %84 = tpu.matmul %83, %82, %cst_32 {dimension_numbers = #tpu.dot_dimension_numbers<[1], [0], [0], [1], [0, 0, 1, 1], [], []>} : vector<32x16xf32>, vector<16x128xf32>, vector<32x128xf32> -> vector<32x128xf32>
    %85 = arith.addf %81, %84 : vector<32x128xf32>
    %c0_33 = arith.constant 0 : index
    %c0_34 = arith.constant 0 : index
    %86 = vector.load %arg8[%c0_33, %c0_34] : memref<56x128xf32, #tpu.memory_space<vmem>>, vector<32x128xf32>
    tpu.vector_store %arg8[%c0_33, %c0_34], %85 {strides = array<i32>} : memref<56x128xf32, #tpu.memory_space<vmem>>, vector<32x128xf32>,
    %87 = vector.extract_strided_slice %27 {offsets = [0, 0], sizes = [8, 128], strides = [1, 1]} : vector<24x128xf32> to vector<8x128xf32>
    %88 = arith.mulf %87, %57 : vector<8x128xf32>
    %c32 = arith.constant 32 : index
    %c0_35 = arith.constant 0 : index
    %89 = vector.load %arg8[%c32, %c0_35] : memref<56x128xf32, #tpu.memory_space<vmem>>, vector<8x128xf32>
    tpu.vector_store %arg8[%c32, %c0_35], %88 {strides = array<i32>} : memref<56x128xf32, #tpu.memory_space<vmem>>, vector<8x128xf32>,
    %90 = vector.extract_strided_slice %27 {offsets = [8, 0], sizes = [8, 128], strides = [1, 1]} : vector<24x128xf32> to vector<8x128xf32>
    %91 = arith.mulf %90, %57 : vector<8x128xf32>
    %c40 = arith.constant 40 : index
    %c0_36 = arith.constant 0 : index
    %92 = vector.load %arg8[%c40, %c0_36] : memref<56x128xf32, #tpu.memory_space<vmem>>, vector<8x128xf32>
    tpu.vector_store %arg8[%c40, %c0_36], %91 {strides = array<i32>} : memref<56x128xf32, #tpu.memory_space<vmem>>, vector<8x128xf32>,
    %93 = vector.extract_strided_slice %27 {offsets = [16, 0], sizes = [8, 128], strides = [1, 1]} : vector<24x128xf32> to vector<8x128xf32>
    %94 = arith.mulf %93, %57 : vector<8x128xf32>
    %c48 = arith.constant 48 : index
    %c0_37 = arith.constant 0 : index
    %95 = vector.load %arg8[%c48, %c0_37] : memref<56x128xf32, #tpu.memory_space<vmem>>, vector<8x128xf32>
    tpu.vector_store %arg8[%c48, %c0_37], %94 {strides = array<i32>} : memref<56x128xf32, #tpu.memory_space<vmem>>, vector<8x128xf32>,
    return
  }
  func.func @transform_0(%arg0: i32) -> (i32, i32) {
    %c0_i32 = arith.constant 0 : i32
    %c0_i32_0 = arith.constant 0 : i32
    return %c0_i32, %arg0 : i32, i32
  }
  func.func @transform_1(%arg0: i32) -> (i32, i32) {
    %c0_i32 = arith.constant 0 : i32
    %c0_i32_0 = arith.constant 0 : i32
    %c0_i32_1 = arith.constant 0 : i32
    return %c0_i32, %c0_i32_0 : i32, i32
  }
  func.func @transform_2(%arg0: i32) -> (i32, i32) {
    %c0_i32 = arith.constant 0 : i32
    %c0_i32_0 = arith.constant 0 : i32
    %c0_i32_1 = arith.constant 0 : i32
    return %c0_i32, %c0_i32_0 : i32, i32
  }
  func.func @transform_3(%arg0: i32) -> (i32, i32) {
    %c0_i32 = arith.constant 0 : i32
    %c0_i32_0 = arith.constant 0 : i32
    %c0_i32_1 = arith.constant 0 : i32
    return %c0_i32, %c0_i32_0 : i32, i32
  }
  func.func @transform_4(%arg0: i32) -> (i32, i32) {
    %c0_i32 = arith.constant 0 : i32
    %c0_i32_0 = arith.constant 0 : i32
    %c0_i32_1 = arith.constant 0 : i32
    return %c0_i32, %c0_i32_0 : i32, i32
  }
  func.func @transform_5(%arg0: i32) -> (i32, i32) {
    %c0_i32 = arith.constant 0 : i32
    %c0_i32_0 = arith.constant 0 : i32
    %c0_i32_1 = arith.constant 0 : i32
    return %c0_i32, %c0_i32_0 : i32, i32
  }
  func.func @transform_6(%arg0: i32) -> (i32, i32) {
    %c0_i32 = arith.constant 0 : i32
    %c0_i32_0 = arith.constant 0 : i32
    %c0_i32_1 = arith.constant 0 : i32
    return %c0_i32, %c0_i32_0 : i32, i32
  }
  func.func @transform_7(%arg0: i32) -> (i32, i32) {
    %c0_i32 = arith.constant 0 : i32
    %c0_i32_0 = arith.constant 0 : i32
    return %c0_i32, %arg0 : i32, i32
  }
}

module attributes {stable_mosaic.version = 11 : i64} {
  func.func @kernel(%arg0: i32, %arg1: memref<64x128xf32, #tpu.memory_space<vmem>>, %arg2: memref<24x24xf32, #tpu.memory_space<vmem>>, %arg3: memref<16x40xf32, #tpu.memory_space<vmem>>, %arg4: memref<16x8xf32, #tpu.memory_space<vmem>>, %arg5: memref<24x24xf32, #tpu.memory_space<vmem>>, %arg6: memref<16x3xf32, #tpu.memory_space<vmem>>, %arg7: memref<40x128xf32, #tpu.memory_space<vmem>>) attributes {dimension_semantics = [#tpu.dimension_semantics<parallel>], iteration_bounds = array<i64: 1>, scalar_prefetch = 0 : i64, scratch_operands = 0 : i64, tpu.core_type = #tpu.core_type<tc>, window_params = [{transform_indices = @transform_0, window_bounds = array<i64: 64, 128>}, {pipeline_mode = #tpu.pipeline_mode<synchronous>, transform_indices = @transform_1, window_bounds = array<i64: 24, 24>}, {pipeline_mode = #tpu.pipeline_mode<synchronous>, transform_indices = @transform_2, window_bounds = array<i64: 16, 40>}, {pipeline_mode = #tpu.pipeline_mode<synchronous>, transform_indices = @transform_3, window_bounds = array<i64: 16, 8>}, {pipeline_mode = #tpu.pipeline_mode<synchronous>, transform_indices = @transform_4, window_bounds = array<i64: 24, 24>}, {pipeline_mode = #tpu.pipeline_mode<synchronous>, transform_indices = @transform_5, window_bounds = array<i64: 16, 3>}, {transform_indices = @transform_6, window_bounds = array<i64: 40, 128>}]} {
    %c0 = arith.constant 0 : index
    %c0_0 = arith.constant 0 : index
    %0 = vector.load %arg1[%c0, %c0_0] : memref<64x128xf32, #tpu.memory_space<vmem>>, vector<40x128xf32>
    %c40 = arith.constant 40 : index
    %c0_1 = arith.constant 0 : index
    %1 = vector.load %arg1[%c40, %c0_1] : memref<64x128xf32, #tpu.memory_space<vmem>>, vector<24x128xf32>
    %c0_2 = arith.constant 0 : index
    %c0_3 = arith.constant 0 : index
    %2 = vector.load %arg2[%c0_2, %c0_3] : memref<24x24xf32, #tpu.memory_space<vmem>>, vector<24x24xf32>
    %cst = arith.constant dense<0.000000e+00> : vector<24x128xf32>
    %3 = tpu.matmul %2, %1, %cst {dimension_numbers = #tpu.dot_dimension_numbers<[1], [0], [0], [1], [0, 0, 1, 1], [], []>} : vector<24x24xf32>, vector<24x128xf32>, vector<24x128xf32> -> vector<24x128xf32>
    %4 = vector.extract_strided_slice %3 {offsets = [0, 0], sizes = [8, 128], strides = [1, 1]} : vector<24x128xf32> to vector<8x128xf32>
    %5 = vector.extract_strided_slice %3 {offsets = [0, 0], sizes = [8, 128], strides = [1, 1]} : vector<24x128xf32> to vector<8x128xf32>
    %6 = arith.mulf %4, %5 : vector<8x128xf32>
    %7 = vector.extract_strided_slice %3 {offsets = [8, 0], sizes = [8, 128], strides = [1, 1]} : vector<24x128xf32> to vector<8x128xf32>
    %8 = vector.extract_strided_slice %3 {offsets = [8, 0], sizes = [8, 128], strides = [1, 1]} : vector<24x128xf32> to vector<8x128xf32>
    %9 = arith.mulf %7, %8 : vector<8x128xf32>
    %10 = arith.addf %6, %9 : vector<8x128xf32>
    %11 = vector.extract_strided_slice %3 {offsets = [16, 0], sizes = [8, 128], strides = [1, 1]} : vector<24x128xf32> to vector<8x128xf32>
    %12 = vector.extract_strided_slice %3 {offsets = [16, 0], sizes = [8, 128], strides = [1, 1]} : vector<24x128xf32> to vector<8x128xf32>
    %13 = arith.mulf %11, %12 : vector<8x128xf32>
    %14 = arith.addf %10, %13 : vector<8x128xf32>
    %cst_4 = arith.constant 9.99999993E-9 : f32
    %15 = vector.broadcast %cst_4 : f32 to vector<8x128xf32>
    %16 = arith.maximumf %14, %15 : vector<8x128xf32>
    %17 = math.sqrt %16 : vector<8x128xf32>
    %c0_5 = arith.constant 0 : index
    %c0_6 = arith.constant 0 : index
    %18 = vector.load %arg3[%c0_5, %c0_6] : memref<16x40xf32, #tpu.memory_space<vmem>>, vector<16x40xf32>
    %cst_7 = arith.constant dense<0.000000e+00> : vector<16x128xf32>
    %19 = tpu.matmul %18, %0, %cst_7 {dimension_numbers = #tpu.dot_dimension_numbers<[1], [0], [0], [1], [0, 0, 1, 1], [], []>} : vector<16x40xf32>, vector<40x128xf32>, vector<16x128xf32> -> vector<16x128xf32>
    %c0_8 = arith.constant 0 : index
    %c0_9 = arith.constant 0 : index
    %20 = vector.load %arg4[%c0_8, %c0_9] : memref<16x8xf32, #tpu.memory_space<vmem>>, vector<16x8xf32>
    %cst_10 = arith.constant dense<0.000000e+00> : vector<16x128xf32>
    %21 = tpu.matmul %20, %17, %cst_10 {dimension_numbers = #tpu.dot_dimension_numbers<[1], [0], [0], [1], [0, 0, 1, 1], [], []>} : vector<16x8xf32>, vector<8x128xf32>, vector<16x128xf32> -> vector<16x128xf32>
    %22 = arith.addf %19, %21 : vector<16x128xf32>
    %c0_11 = arith.constant 0 : index
    %c0_12 = arith.constant 0 : index
    %23 = vector.load %arg6[%c0_11, %c0_12] : memref<16x3xf32, #tpu.memory_space<vmem>>, vector<16x1xf32>
    %24 = vector.broadcast %23 : vector<16x1xf32> to vector<16x128xf32>
    %25 = arith.addf %22, %24 : vector<16x128xf32>
    %c0_13 = arith.constant 0 : index
    %c0_14 = arith.constant 0 : index
    %26 = vector.load %arg5[%c0_13, %c0_14] : memref<24x24xf32, #tpu.memory_space<vmem>>, vector<24x24xf32>
    %cst_15 = arith.constant dense<0.000000e+00> : vector<24x128xf32>
    %27 = tpu.matmul %26, %3, %cst_15 {dimension_numbers = #tpu.dot_dimension_numbers<[1], [0], [0], [1], [0, 0, 1, 1], [], []>} : vector<24x24xf32>, vector<24x128xf32>, vector<24x128xf32> -> vector<24x128xf32>
    %28 = vector.extract_strided_slice %27 {offsets = [0, 0], sizes = [8, 128], strides = [1, 1]} : vector<24x128xf32> to vector<8x128xf32>
    %29 = vector.extract_strided_slice %27 {offsets = [0, 0], sizes = [8, 128], strides = [1, 1]} : vector<24x128xf32> to vector<8x128xf32>
    %30 = arith.mulf %28, %29 : vector<8x128xf32>
    %31 = vector.extract_strided_slice %27 {offsets = [8, 0], sizes = [8, 128], strides = [1, 1]} : vector<24x128xf32> to vector<8x128xf32>
    %32 = vector.extract_strided_slice %27 {offsets = [8, 0], sizes = [8, 128], strides = [1, 1]} : vector<24x128xf32> to vector<8x128xf32>
    %33 = arith.mulf %31, %32 : vector<8x128xf32>
    %34 = arith.addf %30, %33 : vector<8x128xf32>
    %35 = vector.extract_strided_slice %27 {offsets = [16, 0], sizes = [8, 128], strides = [1, 1]} : vector<24x128xf32> to vector<8x128xf32>
    %36 = vector.extract_strided_slice %27 {offsets = [16, 0], sizes = [8, 128], strides = [1, 1]} : vector<24x128xf32> to vector<8x128xf32>
    %37 = arith.mulf %35, %36 : vector<8x128xf32>
    %38 = arith.addf %34, %37 : vector<8x128xf32>
    %cst_16 = arith.constant 9.99999974E-5 : f32
    %39 = vector.broadcast %cst_16 : f32 to vector<8x128xf32>
    %40 = arith.maximumf %38, %39 : vector<8x128xf32>
    %cst_17 = arith.constant 2.000000e-04 : f32
    %41 = vector.broadcast %cst_17 : f32 to vector<8x128xf32>
    %42 = arith.cmpf ogt, %40, %41 : vector<8x128xf32>
    %43 = arith.extui %42 : vector<8x128xi1> to vector<8x128xi32>
    %44 = arith.sitofp %43 : vector<8x128xi32> to vector<8x128xf32>
    %45 = arith.mulf %40, %44 : vector<8x128xf32>
    %cst_18 = arith.constant dense<0.000000e+00> : vector<128xf32>
    %46 = vector.multi_reduction <add>, %45, %cst_18 [0] : vector<8x128xf32> to vector<128xf32>
    %47 = vector.shape_cast %46 : vector<128xf32> to vector<1x128xf32>
    %cst_19 = arith.constant dense<0.000000e+00> : vector<128xf32>
    %48 = vector.multi_reduction <add>, %44, %cst_19 [0] : vector<8x128xf32> to vector<128xf32>
    %49 = vector.shape_cast %48 : vector<128xf32> to vector<1x128xf32>
    %cst_20 = arith.constant 9.99999974E-5 : f32
    %50 = vector.broadcast %cst_20 : f32 to vector<1x128xf32>
    %51 = arith.addf %50, %49 : vector<1x128xf32>
    %52 = arith.divf %47, %51 : vector<1x128xf32>
    %cst_21 = arith.constant 9.99999974E-5 : f32
    %53 = vector.broadcast %cst_21 : f32 to vector<1x128xf32>
    %54 = arith.addf %52, %53 : vector<1x128xf32>
    %55 = math.rsqrt %54 : vector<1x128xf32>
    %56 = vector.broadcast %55 : vector<1x128xf32> to vector<8x128xf32>
    %57 = arith.mulf %44, %56 : vector<8x128xf32>
    %cst_22 = arith.constant dense<0.000000e+00> : vector<128xf32>
    %58 = vector.multi_reduction <add>, %25, %cst_22 [0] : vector<16x128xf32> to vector<128xf32>
    %59 = vector.shape_cast %58 : vector<128xf32> to vector<1x128xf32>
    %cst_23 = arith.constant 1.600000e+01 : f32
    %60 = vector.broadcast %cst_23 : f32 to vector<1x128xf32>
    %61 = arith.divf %59, %60 : vector<1x128xf32>
    %62 = vector.broadcast %61 : vector<1x128xf32> to vector<16x128xf32>
    %63 = arith.subf %25, %62 : vector<16x128xf32>
    %64 = arith.mulf %63, %63 : vector<16x128xf32>
    %cst_24 = arith.constant dense<0.000000e+00> : vector<128xf32>
    %65 = vector.multi_reduction <add>, %64, %cst_24 [0] : vector<16x128xf32> to vector<128xf32>
    %66 = vector.shape_cast %65 : vector<128xf32> to vector<1x128xf32>
    %cst_25 = arith.constant 1.600000e+01 : f32
    %67 = vector.broadcast %cst_25 : f32 to vector<1x128xf32>
    %68 = arith.divf %66, %67 : vector<1x128xf32>
    %69 = vector.broadcast %61 : vector<1x128xf32> to vector<16x128xf32>
    %70 = arith.subf %25, %69 : vector<16x128xf32>
    %cst_26 = arith.constant 9.99999974E-6 : f32
    %71 = vector.broadcast %cst_26 : f32 to vector<1x128xf32>
    %72 = arith.addf %68, %71 : vector<1x128xf32>
    %73 = math.rsqrt %72 : vector<1x128xf32>
    %74 = vector.broadcast %73 : vector<1x128xf32> to vector<16x128xf32>
    %75 = arith.mulf %70, %74 : vector<16x128xf32>
    %c0_27 = arith.constant 0 : index
    %c1 = arith.constant 1 : index
    %76 = vector.load %arg6[%c0_27, %c1] : memref<16x3xf32, #tpu.memory_space<vmem>>, vector<16x1xf32>
    %77 = vector.broadcast %76 : vector<16x1xf32> to vector<16x128xf32>
    %78 = arith.mulf %75, %77 : vector<16x128xf32>
    %c0_28 = arith.constant 0 : index
    %c2 = arith.constant 2 : index
    %79 = vector.load %arg6[%c0_28, %c2] : memref<16x3xf32, #tpu.memory_space<vmem>>, vector<16x1xf32>
    %80 = vector.broadcast %79 : vector<16x1xf32> to vector<16x128xf32>
    %81 = arith.addf %78, %80 : vector<16x128xf32>
    %c0_29 = arith.constant 0 : index
    %c0_30 = arith.constant 0 : index
    %82 = vector.load %arg7[%c0_29, %c0_30] : memref<40x128xf32, #tpu.memory_space<vmem>>, vector<16x128xf32>
    tpu.vector_store %arg7[%c0_29, %c0_30], %81 {strides = array<i32>} : memref<40x128xf32, #tpu.memory_space<vmem>>, vector<16x128xf32>,
    %83 = vector.extract_strided_slice %27 {offsets = [0, 0], sizes = [8, 128], strides = [1, 1]} : vector<24x128xf32> to vector<8x128xf32>
    %84 = arith.mulf %83, %57 : vector<8x128xf32>
    %c16 = arith.constant 16 : index
    %c0_31 = arith.constant 0 : index
    %85 = vector.load %arg7[%c16, %c0_31] : memref<40x128xf32, #tpu.memory_space<vmem>>, vector<8x128xf32>
    tpu.vector_store %arg7[%c16, %c0_31], %84 {strides = array<i32>} : memref<40x128xf32, #tpu.memory_space<vmem>>, vector<8x128xf32>,
    %86 = vector.extract_strided_slice %27 {offsets = [8, 0], sizes = [8, 128], strides = [1, 1]} : vector<24x128xf32> to vector<8x128xf32>
    %87 = arith.mulf %86, %57 : vector<8x128xf32>
    %c24 = arith.constant 24 : index
    %c0_32 = arith.constant 0 : index
    %88 = vector.load %arg7[%c24, %c0_32] : memref<40x128xf32, #tpu.memory_space<vmem>>, vector<8x128xf32>
    tpu.vector_store %arg7[%c24, %c0_32], %87 {strides = array<i32>} : memref<40x128xf32, #tpu.memory_space<vmem>>, vector<8x128xf32>,
    %89 = vector.extract_strided_slice %27 {offsets = [16, 0], sizes = [8, 128], strides = [1, 1]} : vector<24x128xf32> to vector<8x128xf32>
    %90 = arith.mulf %89, %57 : vector<8x128xf32>
    %c32 = arith.constant 32 : index
    %c0_33 = arith.constant 0 : index
    %91 = vector.load %arg7[%c32, %c0_33] : memref<40x128xf32, #tpu.memory_space<vmem>>, vector<8x128xf32>
    tpu.vector_store %arg7[%c32, %c0_33], %90 {strides = array<i32>} : memref<40x128xf32, #tpu.memory_space<vmem>>, vector<8x128xf32>,
    return
  }
  func.func @transform_0(%arg0: i32) -> (i32, i32) {
    %c0_i32 = arith.constant 0 : i32
    %c0_i32_0 = arith.constant 0 : i32
    return %c0_i32, %arg0 : i32, i32
  }
  func.func @transform_1(%arg0: i32) -> (i32, i32) {
    %c0_i32 = arith.constant 0 : i32
    %c0_i32_0 = arith.constant 0 : i32
    %c0_i32_1 = arith.constant 0 : i32
    return %c0_i32, %c0_i32_0 : i32, i32
  }
  func.func @transform_2(%arg0: i32) -> (i32, i32) {
    %c0_i32 = arith.constant 0 : i32
    %c0_i32_0 = arith.constant 0 : i32
    %c0_i32_1 = arith.constant 0 : i32
    return %c0_i32, %c0_i32_0 : i32, i32
  }
  func.func @transform_3(%arg0: i32) -> (i32, i32) {
    %c0_i32 = arith.constant 0 : i32
    %c0_i32_0 = arith.constant 0 : i32
    %c0_i32_1 = arith.constant 0 : i32
    return %c0_i32, %c0_i32_0 : i32, i32
  }
  func.func @transform_4(%arg0: i32) -> (i32, i32) {
    %c0_i32 = arith.constant 0 : i32
    %c0_i32_0 = arith.constant 0 : i32
    %c0_i32_1 = arith.constant 0 : i32
    return %c0_i32, %c0_i32_0 : i32, i32
  }
  func.func @transform_5(%arg0: i32) -> (i32, i32) {
    %c0_i32 = arith.constant 0 : i32
    %c0_i32_0 = arith.constant 0 : i32
    %c0_i32_1 = arith.constant 0 : i32
    return %c0_i32, %c0_i32_0 : i32, i32
  }
  func.func @transform_6(%arg0: i32) -> (i32, i32) {
    %c0_i32 = arith.constant 0 : i32
    %c0_i32_0 = arith.constant 0 : i32
    return %c0_i32, %arg0 : i32, i32
  }
}

</mosaic_0001>

<llo_original>
// kernel: gvp_graph_embedding_forward.2
$region0: #{gvp_graph_embedding_forward.2}
  #allocation0 [shape = 'u32[]', space=smem, size = 0x4, offset = 0x4, fixed_abs, tag = 'smem constant byte address 0x4 - core index']
  #allocation1 [shape = 'u32[144,128]{1,0:T(1,128)}', space=vmem, size = 0x12000, scoped, tag = 'internal scratch']
  %s0 = inlined_call_operand.vmem [shape: f32[48,128], index: 0, kind: input, shape index: {}]
  %s1 = inlined_call_operand.vmem [shape: f32[24,24], index: 1, kind: input, shape index: {}]
  %s2 = inlined_call_operand.vmem [shape: f32[32,8], index: 2, kind: input, shape index: {}]
  %s3 = inlined_call_operand.vmem [shape: f32[32,8], index: 3, kind: input, shape index: {}]
  %s4 = inlined_call_operand.vmem [shape: f32[24,24], index: 4, kind: input, shape index: {}]
  %s5 = inlined_call_operand.vmem [shape: f32[32,16], index: 5, kind: input, shape index: {}]
  %s6 = inlined_call_operand.vmem [shape: f32[32,3], index: 6, kind: input, shape index: {}]
  %s7 = inlined_call_operand.vmem [shape: f32[56,128], index: 7, kind: output, shape index: {}]
  %s8 = sld [smem:[#allocation0]]
  $region38: #{gvp_graph_embedding_forward.2} parent=0
    _
  %s10 = ssub.s32 1, %s8
  %s11 = scalar_select 0, %s10, %s8
  // Predicated region
  $region2: #{gvp_graph_embedding_forward.2} parent=0 // pred_check
    _
  $region3: #{gvp_graph_embedding_forward.2} parent=0 // pred_check_branch
    %13 = sbr.rel (0) target = $region5
  $region4: #{gvp_graph_embedding_forward.2} parent=0 // pred_region
    _
  $region5: #{gvp_graph_embedding_forward.2} parent=0 // pred_fallthru
    _
  // Predicated region
  $region6: #{gvp_graph_embedding_forward.2} parent=0 // pred_check
    _
  $region7: #{gvp_graph_embedding_forward.2} parent=0 // pred_check_branch
    %15 = sbr.rel (0) target = $region9
  $region8: #{gvp_graph_embedding_forward.2} parent=0 // pred_region
    _
  $region9: #{gvp_graph_embedding_forward.2} parent=0 // pred_fallthru
    _
  // Predicated region
  $region10: #{gvp_graph_embedding_forward.2} parent=0 // pred_check
    _
  $region11: #{gvp_graph_embedding_forward.2} parent=0 // pred_check_branch
    %17 = sbr.rel (0) target = $region13
  $region12: #{gvp_graph_embedding_forward.2} parent=0 // pred_region
    _
  $region13: #{gvp_graph_embedding_forward.2} parent=0 // pred_fallthru
    _
  // Predicated region
  $region14: #{gvp_graph_embedding_forward.2} parent=0 // pred_check
    _
  $region15: #{gvp_graph_embedding_forward.2} parent=0 // pred_check_branch
    %19 = sbr.rel (0) target = $region17
  $region16: #{gvp_graph_embedding_forward.2} parent=0 // pred_region
    _
  $region17: #{gvp_graph_embedding_forward.2} parent=0 // pred_fallthru
    _
  // Predicated region
  $region18: #{gvp_graph_embedding_forward.2} parent=0 // pred_check
    _
  $region19: #{gvp_graph_embedding_forward.2} parent=0 // pred_check_branch
    %21 = sbr.rel (0) target = $region21
  $region20: #{gvp_graph_embedding_forward.2} parent=0 // pred_region
    _
  $region21: #{gvp_graph_embedding_forward.2} parent=0 // pred_fallthru
    _
  // Predicated region
  $region22: #{gvp_graph_embedding_forward.2} parent=0 // pred_check
    _
  $region23: #{gvp_graph_embedding_forward.2} parent=0 // pred_check_branch
    %23 = sbr.rel (0) target = $region25
  $region24: #{gvp_graph_embedding_forward.2} parent=0 // pred_region
    _
  $region25: #{gvp_graph_embedding_forward.2} parent=0 // pred_fallthru
    _
  // Predicated region
  $region26: #{gvp_graph_embedding_forward.2} parent=0 // pred_check
    _
  $region27: #{gvp_graph_embedding_forward.2} parent=0 // pred_check_branch
    %25 = sbr.rel (0) target = $region29
  $region28: #{gvp_graph_embedding_forward.2} parent=0 // pred_region
    _
  $region29: #{gvp_graph_embedding_forward.2} parent=0 // pred_fallthru
    _
  %v26 = vld [vmem:[%s0] sm:$0xff]
  %v27 = vld [vmem:[%s0 + $0x18] sm:$0xff]
  %v28 = vld [vmem:[%s0 + $0x20] sm:$0xff]
  %v29 = vld [vmem:[%s0 + $0x28] sm:$0xff]
  %v30 = vld [vmem:[%s1] sm:$0xff]
  %v31 = vld [vmem:[%s1 + $0x8] sm:$0xff]
  %v32 = vld [vmem:[%s1 + $0x10] sm:$0xff]
  %vm33 = vcmask 195584
  %v35 = vsel %vm33, %v30, 0
  %v38 = vsel %vm33, %v31, 0
  %v41 = vsel %vm33, %v32, 0
  %43 = vmatprep.subr.mxu0 0.0
  %44 = vmatpush1.msra.mxu0 %v27
  %45 = vmatprep.subr.mxu0 0.0
  %46 = vmatpush1.msra.mxu0 %v28
  %47 = vmatprep.subr.mxu0 0.0
  %48 = vmatpush1.msra.mxu0 %v29
  %49 = vmatprep.subr.mxu0 0.0
  %50 = vmatpush1.msra.mxu0 0.0
  %51 = vmatprep.subr.mxu0 0.0
  %52 = vmatpush1.msra.mxu0 0.0
  %53 = vmatprep.subr.mxu0 0.0
  %54 = vmatpush1.msra.mxu0 0.0
  %55 = vmatprep.subr.mxu0 0.0
  %56 = vmatpush1.msra.mxu0 0.0
  %57 = vmatprep.subr.mxu0 0.0
  %58 = vmatpush1.msra.mxu0 0.0
  %59 = vmatprep.subr.mxu0 0.0
  %60 = vmatpush1.msra.mxu0 0.0
  %61 = vmatprep.subr.mxu0 0.0
  %62 = vmatpush1.msra.mxu0 0.0
  %63 = vmatprep.subr.mxu0 0.0
  %64 = vmatpush1.msra.mxu0 0.0
  %65 = vmatprep.subr.mxu0 0.0
  %66 = vmatpush1.msra.mxu0 0.0
  %67 = vmatprep.subr.mxu0 0.0
  %68 = vmatpush1.msra.mxu0 0.0
  %69 = vmatprep.subr.mxu0 0.0
  %70 = vmatpush1.msra.mxu0 0.0
  %71 = vmatprep.subr.mxu0 0.0
  %72 = vmatpush1.msra.mxu0 0.0
  %73 = vmatprep.subr.mxu0 0.0
  %74 = vmatpush1.msra.mxu0 0.0
  %75 = vmatprep.subr.mxu0 0.0
  %76 = vmatpush1.msra.mxu0 0.0
  %77 = vmatprep.subr.mxu0 0.0
  %78 = vmatpush1.msra.mxu0 0.0
  %79 = vmatprep.subr.mxu0 0.0
  %80 = vmatpush1.msra.mxu0 0.0
  %81 = vmatprep.subr.mxu0 0.0
  %82 = vmatpush1.msra.mxu0 0.0
  %83 = vmatprep.subr.mxu0 0.0
  %84 = vmatpush1.msra.mxu0 0.0
  %85 = vmatprep.subr.mxu0 0.0
  %86 = vmatpush1.msra.mxu0 0.0
  %87 = vmatprep.subr.mxu0 0.0
  %88 = vmatpush1.msra.mxu0 0.0
  %89 = vmatprep.subr.mxu0 0.0
  %90 = vmatpush1.msra.mxu0 0.0
  %91 = vmatprep.subr.mxu0 0.0
  %92 = vmatpush1.msra.mxu0 0.0
  %93 = vmatprep.subr.mxu0 0.0
  %94 = vmatpush1.msra.mxu0 0.0
  %95 = vmatprep.subr.mxu0 0.0
  %96 = vmatpush1.msra.mxu0 0.0
  %97 = vmatprep.subr.mxu0 0.0
  %98 = vmatpush1.msra.mxu0 0.0
  %99 = vmatprep.subr.mxu0 0.0
  %100 = vmatpush1.msra.mxu0 0.0
  %101 = vmatprep.subr.mxu0 0.0
  %102 = vmatpush1.msra.mxu0 0.0
  %103 = vmatprep.subr.mxu0 0.0
  %104 = vmatpush1.msra.mxu0 0.0
  %105 = vmatprep.subr.mxu0 0.0
  %106 = vmatpush1.msra.mxu0 0.0
  %107 = vmatprep.mubr.f32.mxu0 0.0
  %108 = vmatmul.mubr.f32.gmra.mrb[0].mxu0 %v35
  %v109 = vpop.f32.mrb[0].mxu0
  %v110 = vadd.f32 0.0, %v109
  %v111 = vpop.f32.mrb[0].mxu0
  %112 = vmatprep.mubr.f32.mxu0 0.0
  %113 = vmatmul.mubr.f32.gmra.mrb[0].mxu0 %v38
  %v114 = vpop.f32.mrb[0].mxu0
  %v115 = vadd.f32 0.0, %v114
  %v116 = vpop.f32.mrb[0].mxu0
  %117 = vmatprep.mubr.f32.mxu0 0.0
  %118 = vmatmul.mubr.f32.gmra.mrb[0].mxu0 %v41
  %v119 = vpop.f32.mrb[0].mxu0
  %v120 = vadd.f32 0.0, %v119
  %v121 = vpop.f32.mrb[0].mxu0
  %122 = vdwg.mxu0
  %v123 = vmul.f32 %v110, %v110
  %v124 = vmul.f32 %v115, %v115
  %v125 = vadd.f32 %v123, %v124
  %v126 = vmul.f32 %v120, %v120
  %v127 = vadd.f32 %v125, %v126
  %v128 = vmax.f32 %v127, 1e-08
  %v129 = vrsqrt.pop %v128
  %v130 = vmul.f32 %v128, %v129
  %vm131 = vcmp.eq.f32.partialorder %v128, inf
  %v132 = vsel %vm131, %v128, %v130
  %vm133 = vcmp.eq.f32.partialorder %v128, 0.0
  %v134 = vand.u32 %v128, 2147483648
  %v135 = vsel %vm133, %v134, %v132
  %v136 = vld [vmem:[%s2] sm:$0xff]
  %v137 = vld [vmem:[%s2 + $0x8] sm:$0xff]
  %v138 = vld [vmem:[%s2 + $0x10] sm:$0xff]
  %v139 = vld [vmem:[%s2 + $0x18] sm:$0xff]
  %v140 = vld [vmem:[%s3] sm:$0xff]
  %v141 = vld [vmem:[%s3 + $0x8] sm:$0xff]
  %v142 = vld [vmem:[%s3 + $0x10] sm:$0xff]
  %v143 = vld [vmem:[%s3 + $0x18] sm:$0xff]
  %vm144 = vcmask 64512
  %v146 = vsel %vm144, %v140, 0
  %v149 = vsel %vm144, %v141, 0
  %v152 = vsel %vm144, %v142, 0
  %v155 = vsel %vm144, %v143, 0
  %157 = vmatprep.subr.mxu0 0.0
  %158 = vmatpush1.msra.mxu0 %v135
  %159 = vmatprep.subr.mxu0 0.0
  %160 = vmatpush1.msra.mxu0 0.0
  %161 = vmatprep.subr.mxu0 0.0
  %162 = vmatpush1.msra.mxu0 0.0
  %163 = vmatprep.subr.mxu0 0.0
  %164 = vmatpush1.msra.mxu0 0.0
  %165 = vmatprep.subr.mxu0 0.0
  %166 = vmatpush1.msra.mxu0 0.0
  %167 = vmatprep.subr.mxu0 0.0
  %168 = vmatpush1.msra.mxu0 0.0
  %169 = vmatprep.subr.mxu0 0.0
  %170 = vmatpush1.msra.mxu0 0.0
  %171 = vmatprep.subr.mxu0 0.0
  %172 = vmatpush1.msra.mxu0 0.0
  %173 = vmatprep.subr.mxu0 0.0
  %174 = vmatpush1.msra.mxu0 0.0
  %175 = vmatprep.subr.mxu0 0.0
  %176 = vmatpush1.msra.mxu0 0.0
  %177 = vmatprep.subr.mxu0 0.0
  %178 = vmatpush1.msra.mxu0 0.0
  %179 = vmatprep.subr.mxu0 0.0
  %180 = vmatpush1.msra.mxu0 0.0
  %181 = vmatprep.subr.mxu0 0.0
  %182 = vmatpush1.msra.mxu0 0.0
  %183 = vmatprep.subr.mxu0 0.0
  %184 = vmatpush1.msra.mxu0 0.0
  %185 = vmatprep.subr.mxu0 0.0
  %186 = vmatpush1.msra.mxu0 0.0
  %187 = vmatprep.subr.mxu0 0.0
  %188 = vmatpush1.msra.mxu0 0.0
  %189 = vmatprep.subr.mxu0 0.0
  %190 = vmatpush1.msra.mxu0 0.0
  %191 = vmatprep.subr.mxu0 0.0
  %192 = vmatpush1.msra.mxu0 0.0
  %193 = vmatprep.subr.mxu0 0.0
  %194 = vmatpush1.msra.mxu0 0.0
  %195 = vmatprep.subr.mxu0 0.0
  %196 = vmatpush1.msra.mxu0 0.0
  %197 = vmatprep.subr.mxu0 0.0
  %198 = vmatpush1.msra.mxu0 0.0
  %199 = vmatprep.subr.mxu0 0.0
  %200 = vmatpush1.msra.mxu0 0.0
  %201 = vmatprep.subr.mxu0 0.0
  %202 = vmatpush1.msra.mxu0 0.0
  %203 = vmatprep.subr.mxu0 0.0
  %204 = vmatpush1.msra.mxu0 0.0
  %205 = vmatprep.subr.mxu0 0.0
  %206 = vmatpush1.msra.mxu0 0.0
  %207 = vmatprep.subr.mxu0 0.0
  %208 = vmatpush1.msra.mxu0 0.0
  %209 = vmatprep.subr.mxu0 0.0
  %210 = vmatpush1.msra.mxu0 0.0
  %211 = vmatprep.subr.mxu0 0.0
  %212 = vmatpush1.msra.mxu0 0.0
  %213 = vmatprep.subr.mxu0 0.0
  %214 = vmatpush1.msra.mxu0 0.0
  %215 = vmatprep.subr.mxu0 0.0
  %216 = vmatpush1.msra.mxu0 0.0
  %217 = vmatprep.subr.mxu0 0.0
  %218 = vmatpush1.msra.mxu0 0.0
  %219 = vmatprep.subr.mxu0 0.0
  %220 = vmatpush1.msra.mxu0 0.0
  %221 = vmatprep.mubr.f32.mxu0 0.0
  %222 = vmatmul.mubr.f32.gmra.mrb[0].mxu0 %v146
  %v223 = vpop.f32.mrb[0].mxu0
  %v224 = vadd.f32 0.0, %v223
  %v225 = vpop.f32.mrb[0].mxu0
  %226 = vmatprep.mubr.f32.mxu0 0.0
  %227 = vmatmul.mubr.f32.gmra.mrb[0].mxu0 %v149
  %v228 = vpop.f32.mrb[0].mxu0
  %v229 = vadd.f32 0.0, %v228
  %v230 = vpop.f32.mrb[0].mxu0
  %231 = vmatprep.mubr.f32.mxu0 0.0
  %232 = vmatmul.mubr.f32.gmra.mrb[0].mxu0 %v152
  %v233 = vpop.f32.mrb[0].mxu0
  %v234 = vadd.f32 0.0, %v233
  %v235 = vpop.f32.mrb[0].mxu0
  %236 = vmatprep.mubr.f32.mxu0 0.0
  %237 = vmatmul.mubr.f32.gmra.mrb[0].mxu0 %v155
  %v238 = vpop.f32.mrb[0].mxu0
  %v239 = vadd.f32 0.0, %v238
  %v240 = vpop.f32.mrb[0].mxu0
  %241 = vdwg.mxu0
  %v243 = vsel %vm144, %v136, 0
  %v246 = vsel %vm144, %v137, 0
  %v249 = vsel %vm144, %v138, 0
  %v252 = vsel %vm144, %v139, 0
  %254 = vmatprep.subr.mxu0 0.0
  %255 = vmatpush1.msra.mxu0 %v26
  %256 = vmatprep.subr.mxu0 0.0
  %257 = vmatpush1.msra.mxu0 0.0
  %258 = vmatprep.subr.mxu0 0.0
  %259 = vmatpush1.msra.mxu0 0.0
  %260 = vmatprep.subr.mxu0 0.0
  %261 = vmatpush1.msra.mxu0 0.0
  %262 = vmatprep.subr.mxu0 0.0
  %263 = vmatpush1.msra.mxu0 0.0
  %264 = vmatprep.subr.mxu0 0.0
  %265 = vmatpush1.msra.mxu0 0.0
  %266 = vmatprep.subr.mxu0 0.0
  %267 = vmatpush1.msra.mxu0 0.0
  %268 = vmatprep.subr.mxu0 0.0
  %269 = vmatpush1.msra.mxu0 0.0
  %270 = vmatprep.subr.mxu0 0.0
  %271 = vmatpush1.msra.mxu0 0.0
  %272 = vmatprep.subr.mxu0 0.0
  %273 = vmatpush1.msra.mxu0 0.0
  %274 = vmatprep.subr.mxu0 0.0
  %275 = vmatpush1.msra.mxu0 0.0
  %276 = vmatprep.subr.mxu0 0.0
  %277 = vmatpush1.msra.mxu0 0.0
  %278 = vmatprep.subr.mxu0 0.0
  %279 = vmatpush1.msra.mxu0 0.0
  %280 = vmatprep.subr.mxu0 0.0
  %281 = vmatpush1.msra.mxu0 0.0
  %282 = vmatprep.subr.mxu0 0.0
  %283 = vmatpush1.msra.mxu0 0.0
  %284 = vmatprep.subr.mxu0 0.0
  %285 = vmatpush1.msra.mxu0 0.0
  %286 = vmatprep.subr.mxu0 0.0
  %287 = vmatpush1.msra.mxu0 0.0
  %288 = vmatprep.subr.mxu0 0.0
  %289 = vmatpush1.msra.mxu0 0.0
  %290 = vmatprep.subr.mxu0 0.0
  %291 = vmatpush1.msra.mxu0 0.0
  %292 = vmatprep.subr.mxu0 0.0
  %293 = vmatpush1.msra.mxu0 0.0
  %294 = vmatprep.subr.mxu0 0.0
  %295 = vmatpush1.msra.mxu0 0.0
  %296 = vmatprep.subr.mxu0 0.0
  %297 = vmatpush1.msra.mxu0 0.0
  %298 = vmatprep.subr.mxu0 0.0
  %299 = vmatpush1.msra.mxu0 0.0
  %300 = vmatprep.subr.mxu0 0.0
  %301 = vmatpush1.msra.mxu0 0.0
  %302 = vmatprep.subr.mxu0 0.0
  %303 = vmatpush1.msra.mxu0 0.0
  %304 = vmatprep.subr.mxu0 0.0
  %305 = vmatpush1.msra.mxu0 0.0
  %306 = vmatprep.subr.mxu0 0.0
  %307 = vmatpush1.msra.mxu0 0.0
  %308 = vmatprep.subr.mxu0 0.0
  %309 = vmatpush1.msra.mxu0 0.0
  %310 = vmatprep.subr.mxu0 0.0
  %311 = vmatpush1.msra.mxu0 0.0
  %312 = vmatprep.subr.mxu0 0.0
  %313 = vmatpush1.msra.mxu0 0.0
  %314 = vmatprep.subr.mxu0 0.0
  %315 = vmatpush1.msra.mxu0 0.0
  %316 = vmatprep.subr.mxu0 0.0
  %317 = vmatpush1.msra.mxu0 0.0
  %318 = vmatprep.mubr.f32.mxu0 0.0
  %319 = vmatmul.mubr.f32.gmra.mrb[0].mxu0 %v243
  %v320 = vpop.f32.mrb[0].mxu0
  %v321 = vadd.f32 %v224, %v320
  %v322 = vpop.f32.mrb[0].mxu0
  %323 = vmatprep.mubr.f32.mxu0 0.0
  %324 = vmatmul.mubr.f32.gmra.mrb[0].mxu0 %v246
  %v325 = vpop.f32.mrb[0].mxu0
  %v326 = vadd.f32 %v229, %v325
  %v327 = vpop.f32.mrb[0].mxu0
  %328 = vmatprep.mubr.f32.mxu0 0.0
  %329 = vmatmul.mubr.f32.gmra.mrb[0].mxu0 %v249
  %v330 = vpop.f32.mrb[0].mxu0
  %v331 = vadd.f32 %v234, %v330
  %v332 = vpop.f32.mrb[0].mxu0
  %333 = vmatprep.mubr.f32.mxu0 0.0
  %334 = vmatmul.mubr.f32.gmra.mrb[0].mxu0 %v252
  %v335 = vpop.f32.mrb[0].mxu0
  %v336 = vadd.f32 %v239, %v335
  %v337 = vpop.f32.mrb[0].mxu0
  %338 = vdwg.mxu0
  %v339 = vld [vmem:[%s6] sm:$0xff]
  %v340 = vld [vmem:[%s6 + $0x8] sm:$0xff]
  %v341 = vld [vmem:[%s6 + $0x10] sm:$0xff]
  %v342 = vld [vmem:[%s6 + $0x18] sm:$0xff]
  %344 = vset.pattern.permute.xlu0 0
  %345 = vperm.xlu0 %344, %v339
  %v346 = vpop.permute.xlu0 %345
  %349 = vset.pattern.permute.xlu0 0
  %350 = vperm.xlu0 %349, %v340
  %v351 = vpop.permute.xlu0 %350
  %354 = vset.pattern.permute.xlu0 0
  %355 = vperm.xlu0 %354, %v341
  %v356 = vpop.permute.xlu0 %355
  %359 = vset.pattern.permute.xlu0 0
  %360 = vperm.xlu0 %359, %v342
  %v361 = vpop.permute.xlu0 %360
  %v363 = vadd.f32 %v321, %v346
  %v364 = vadd.f32 %v326, %v351
  %v365 = vadd.f32 %v331, %v356
  %v366 = vadd.f32 %v336, %v361
  %v367 = vld [vmem:[%s4] sm:$0xff]
  %v368 = vld [vmem:[%s4 + $0x8] sm:$0xff]
  %v369 = vld [vmem:[%s4 + $0x10] sm:$0xff]
  %v371 = vsel %vm33, %v367, 0
  %v374 = vsel %vm33, %v368, 0
  %v377 = vsel %vm33, %v369, 0
  %379 = vmatprep.subr.mxu0 0.0
  %380 = vmatpush1.msra.mxu0 %v110
  %381 = vmatprep.subr.mxu0 0.0
  %382 = vmatpush1.msra.mxu0 %v115
  %383 = vmatprep.subr.mxu0 0.0
  %384 = vmatpush1.msra.mxu0 %v120
  %385 = vmatprep.subr.mxu0 0.0
  %386 = vmatpush1.msra.mxu0 0.0
  %387 = vmatprep.subr.mxu0 0.0
  %388 = vmatpush1.msra.mxu0 0.0
  %389 = vmatprep.subr.mxu0 0.0
  %390 = vmatpush1.msra.mxu0 0.0
  %391 = vmatprep.subr.mxu0 0.0
  %392 = vmatpush1.msra.mxu0 0.0
  %393 = vmatprep.subr.mxu0 0.0
  %394 = vmatpush1.msra.mxu0 0.0
  %395 = vmatprep.subr.mxu0 0.0
  %396 = vmatpush1.msra.mxu0 0.0
  %397 = vmatprep.subr.mxu0 0.0
  %398 = vmatpush1.msra.mxu0 0.0
  %399 = vmatprep.subr.mxu0 0.0
  %400 = vmatpush1.msra.mxu0 0.0
  %401 = vmatprep.subr.mxu0 0.0
  %402 = vmatpush1.msra.mxu0 0.0
  %403 = vmatprep.subr.mxu0 0.0
  %404 = vmatpush1.msra.mxu0 0.0
  %405 = vmatprep.subr.mxu0 0.0
  %406 = vmatpush1.msra.mxu0 0.0
  %407 = vmatprep.subr.mxu0 0.0
  %408 = vmatpush1.msra.mxu0 0.0
  %409 = vmatprep.subr.mxu0 0.0
  %410 = vmatpush1.msra.mxu0 0.0
  %411 = vmatprep.subr.mxu0 0.0
  %412 = vmatpush1.msra.mxu0 0.0
  %413 = vmatprep.subr.mxu0 0.0
  %414 = vmatpush1.msra.mxu0 0.0
  %415 = vmatprep.subr.mxu0 0.0
  %416 = vmatpush1.msra.mxu0 0.0
  %417 = vmatprep.subr.mxu0 0.0
  %418 = vmatpush1.msra.mxu0 0.0
  %419 = vmatprep.subr.mxu0 0.0
  %420 = vmatpush1.msra.mxu0 0.0
  %421 = vmatprep.subr.mxu0 0.0
  %422 = vmatpush1.msra.mxu0 0.0
  %423 = vmatprep.subr.mxu0 0.0
  %424 = vmatpush1.msra.mxu0 0.0
  %425 = vmatprep.subr.mxu0 0.0
  %426 = vmatpush1.msra.mxu0 0.0
  %427 = vmatprep.subr.mxu0 0.0
  %428 = vmatpush1.msra.mxu0 0.0
  %429 = vmatprep.subr.mxu0 0.0
  %430 = vmatpush1.msra.mxu0 0.0
  %431 = vmatprep.subr.mxu0 0.0
  %432 = vmatpush1.msra.mxu0 0.0
  %433 = vmatprep.subr.mxu0 0.0
  %434 = vmatpush1.msra.mxu0 0.0
  %435 = vmatprep.subr.mxu0 0.0
  %436 = vmatpush1.msra.mxu0 0.0
  %437 = vmatprep.subr.mxu0 0.0
  %438 = vmatpush1.msra.mxu0 0.0
  %439 = vmatprep.subr.mxu0 0.0
  %440 = vmatpush1.msra.mxu0 0.0
  %441 = vmatprep.subr.mxu0 0.0
  %442 = vmatpush1.msra.mxu0 0.0
  %443 = vmatprep.mubr.f32.mxu0 0.0
  %444 = vmatmul.mubr.f32.gmra.mrb[0].mxu0 %v371
  %v445 = vpop.f32.mrb[0].mxu0
  %v446 = vadd.f32 0.0, %v445
  %v447 = vpop.f32.mrb[0].mxu0
  %448 = vmatprep.mubr.f32.mxu0 0.0
  %449 = vmatmul.mubr.f32.gmra.mrb[0].mxu0 %v374
  %v450 = vpop.f32.mrb[0].mxu0
  %v451 = vadd.f32 0.0, %v450
  %v452 = vpop.f32.mrb[0].mxu0
  %453 = vmatprep.mubr.f32.mxu0 0.0
  %454 = vmatmul.mubr.f32.gmra.mrb[0].mxu0 %v377
  %v455 = vpop.f32.mrb[0].mxu0
  %v456 = vadd.f32 0.0, %v455
  %v457 = vpop.f32.mrb[0].mxu0
  %458 = vdwg.mxu0
  %v459 = vmul.f32 %v446, %v446
  %v460 = vmul.f32 %v451, %v451
  %v461 = vadd.f32 %v459, %v460
  %v462 = vmul.f32 %v456, %v456
  %v463 = vadd.f32 %v461, %v462
  %v464 = vmax.f32 %v463, 0.0001
  %vm465 = vcmp.gt.f32.partialorder %v464, 0.0002
  %v466 = vsel %vm465, 1, 0
  %v467 = vcvt.s32.f32 %v466
  %v468 = vmul.f32 %v464, %v467
  %v469 = vrot.slane %v468, 4
  %v470 = vadd.f32 %v468, %v469
  %v471 = vrot.slane %v470, 2
  %v472 = vadd.f32 %v470, %v471
  %v473 = vrot.slane %v472, 1
  %v474 = vadd.f32 %v472, %v473
  %v475 = vrot.slane %v467, 4
  %v476 = vadd.f32 %v467, %v475
  %v477 = vrot.slane %v476, 2
  %v478 = vadd.f32 %v476, %v477
  %v479 = vrot.slane %v478, 1
  %v480 = vadd.f32 %v478, %v479
  %v481 = vadd.f32 %v480, 0.0001
  %v482 = vrcp.pop %v481
  %v483 = vmul.f32 %v474, %v482
  %v484 = vadd.f32 %v483, 0.0001
  %v485 = vrsqrt.pop %v484
  %v486 = vmul.f32 %v467, %v485
  %v487 = vadd.f32 %v363, %v364
  %v488 = vadd.f32 %v487, %v365
  %v489 = vadd.f32 %v488, %v366
  %v490 = vrot.slane %v489, 4
  %v491 = vadd.f32 %v489, %v490
  %v492 = vrot.slane %v491, 2
  %v493 = vadd.f32 %v491, %v492
  %v494 = vrot.slane %v493, 1
  %v495 = vadd.f32 %v493, %v494
  %v496 = vrcp.pop 32.0
  %v497 = vmul.f32 %v495, %v496
  %v498 = vsub.f32 %v363, %v497
  %v499 = vsub.f32 %v364, %v497
  %v500 = vsub.f32 %v365, %v497
  %v501 = vsub.f32 %v366, %v497
  %v502 = vmul.f32 %v498, %v498
  %v503 = vmul.f32 %v499, %v499
  %v504 = vmul.f32 %v500, %v500
  %v505 = vmul.f32 %v501, %v501
  %v506 = vadd.f32 %v502, %v503
  %v507 = vadd.f32 %v506, %v504
  %v508 = vadd.f32 %v507, %v505
  %v509 = vrot.slane %v508, 4
  %v510 = vadd.f32 %v508, %v509
  %v511 = vrot.slane %v510, 2
  %v512 = vadd.f32 %v510, %v511
  %v513 = vrot.slane %v512, 1
  %v514 = vadd.f32 %v512, %v513
  %v515 = vmul.f32 %v514, %v496
  %v516 = vadd.f32 %v515, 1e-05
  %v517 = vrsqrt.pop %v516
  %v518 = vmul.f32 %v498, %v517
  %v519 = vmul.f32 %v499, %v517
  %v520 = vmul.f32 %v500, %v517
  %v521 = vmul.f32 %v501, %v517
  %522 = vset.pattern.permute.xlu0 1
  %523 = vperm.xlu0 %522, %v339
  %v524 = vpop.permute.xlu0 %523
  %526 = vset.pattern.permute.xlu0 1
  %527 = vperm.xlu0 %526, %v340
  %v528 = vpop.permute.xlu0 %527
  %530 = vset.pattern.permute.xlu0 1
  %531 = vperm.xlu0 %530, %v341
  %v532 = vpop.permute.xlu0 %531
  %534 = vset.pattern.permute.xlu0 1
  %535 = vperm.xlu0 %534, %v342
  %v536 = vpop.permute.xlu0 %535
  %v538 = vmul.f32 %v518, %v524
  %v539 = vmul.f32 %v519, %v528
  %v540 = vmul.f32 %v520, %v532
  %v541 = vmul.f32 %v521, %v536
  %542 = vset.pattern.permute.xlu0 2
  %543 = vperm.xlu0 %542, %v339
  %v544 = vpop.permute.xlu0 %543
  %546 = vset.pattern.permute.xlu0 2
  %547 = vperm.xlu0 %546, %v340
  %v548 = vpop.permute.xlu0 %547
  %550 = vset.pattern.permute.xlu0 2
  %551 = vperm.xlu0 %550, %v341
  %v552 = vpop.permute.xlu0 %551
  %554 = vset.pattern.permute.xlu0 2
  %555 = vperm.xlu0 %554, %v342
  %v556 = vpop.permute.xlu0 %555
  %v558 = vadd.f32 %v538, %v544
  %v559 = vadd.f32 %v539, %v548
  %v560 = vadd.f32 %v540, %v552
  %v561 = vadd.f32 %v541, %v556
  %v562 = vld [vmem:[%s0 + $0x8] sm:$0xff]
  %v563 = vld [vmem:[%s0 + $0x10] sm:$0xff]
  %v564 = vld [vmem:[%s5] sm:$0xff]
  %v565 = vld [vmem:[%s5 + $0x8] sm:$0xff]
  %v566 = vld [vmem:[%s5 + $0x10] sm:$0xff]
  %v567 = vld [vmem:[%s5 + $0x18] sm:$0xff]
  %vm568 = vcmask 130048
  %v570 = vsel %vm568, %v564, 0
  %v573 = vsel %vm568, %v565, 0
  %v576 = vsel %vm568, %v566, 0
  %v579 = vsel %vm568, %v567, 0
  %581 = vmatprep.subr.mxu0 0.0
  %582 = vmatpush1.msra.mxu0 %v562
  %583 = vmatprep.subr.mxu0 0.0
  %584 = vmatpush1.msra.mxu0 %v563
  %585 = vmatprep.subr.mxu0 0.0
  %586 = vmatpush1.msra.mxu0 0.0
  %587 = vmatprep.subr.mxu0 0.0
  %588 = vmatpush1.msra.mxu0 0.0
  %589 = vmatprep.subr.mxu0 0.0
  %590 = vmatpush1.msra.mxu0 0.0
  %591 = vmatprep.subr.mxu0 0.0
  %592 = vmatpush1.msra.mxu0 0.0
  %593 = vmatprep.subr.mxu0 0.0
  %594 = vmatpush1.msra.mxu0 0.0
  %595 = vmatprep.subr.mxu0 0.0
  %596 = vmatpush1.msra.mxu0 0.0
  %597 = vmatprep.subr.mxu0 0.0
  %598 = vmatpush1.msra.mxu0 0.0
  %599 = vmatprep.subr.mxu0 0.0
  %600 = vmatpush1.msra.mxu0 0.0
  %601 = vmatprep.subr.mxu0 0.0
  %602 = vmatpush1.msra.mxu0 0.0
  %603 = vmatprep.subr.mxu0 0.0
  %604 = vmatpush1.msra.mxu0 0.0
  %605 = vmatprep.subr.mxu0 0.0
  %606 = vmatpush1.msra.mxu0 0.0
  %607 = vmatprep.subr.mxu0 0.0
  %608 = vmatpush1.msra.mxu0 0.0
  %609 = vmatprep.subr.mxu0 0.0
  %610 = vmatpush1.msra.mxu0 0.0
  %611 = vmatprep.subr.mxu0 0.0
  %612 = vmatpush1.msra.mxu0 0.0
  %613 = vmatprep.subr.mxu0 0.0
  %614 = vmatpush1.msra.mxu0 0.0
  %615 = vmatprep.subr.mxu0 0.0
  %616 = vmatpush1.msra.mxu0 0.0
  %617 = vmatprep.subr.mxu0 0.0
  %618 = vmatpush1.msra.mxu0 0.0
  %619 = vmatprep.subr.mxu0 0.0
  %620 = vmatpush1.msra.mxu0 0.0
  %621 = vmatprep.subr.mxu0 0.0
  %622 = vmatpush1.msra.mxu0 0.0
  %623 = vmatprep.subr.mxu0 0.0
  %624 = vmatpush1.msra.mxu0 0.0
  %625 = vmatprep.subr.mxu0 0.0
  %626 = vmatpush1.msra.mxu0 0.0
  %627 = vmatprep.subr.mxu0 0.0
  %628 = vmatpush1.msra.mxu0 0.0
  %629 = vmatprep.subr.mxu0 0.0
  %630 = vmatpush1.msra.mxu0 0.0
  %631 = vmatprep.subr.mxu0 0.0
  %632 = vmatpush1.msra.mxu0 0.0
  %633 = vmatprep.subr.mxu0 0.0
  %634 = vmatpush1.msra.mxu0 0.0
  %635 = vmatprep.subr.mxu0 0.0
  %636 = vmatpush1.msra.mxu0 0.0
  %637 = vmatprep.subr.mxu0 0.0
  %638 = vmatpush1.msra.mxu0 0.0
  %639 = vmatprep.subr.mxu0 0.0
  %640 = vmatpush1.msra.mxu0 0.0
  %641 = vmatprep.subr.mxu0 0.0
  %642 = vmatpush1.msra.mxu0 0.0
  %643 = vmatprep.subr.mxu0 0.0
  %644 = vmatpush1.msra.mxu0 0.0
  %645 = vmatprep.mubr.f32.mxu0 0.0
  %646 = vmatmul.mubr.f32.gmra.mrb[0].mxu0 %v570
  %v647 = vpop.f32.mrb[0].mxu0
  %v648 = vadd.f32 0.0, %v647
  %v649 = vpop.f32.mrb[0].mxu0
  %650 = vmatprep.mubr.f32.mxu0 0.0
  %651 = vmatmul.mubr.f32.gmra.mrb[0].mxu0 %v573
  %v652 = vpop.f32.mrb[0].mxu0
  %v653 = vadd.f32 0.0, %v652
  %v654 = vpop.f32.mrb[0].mxu0
  %655 = vmatprep.mubr.f32.mxu0 0.0
  %656 = vmatmul.mubr.f32.gmra.mrb[0].mxu0 %v576
  %v657 = vpop.f32.mrb[0].mxu0
  %v658 = vadd.f32 0.0, %v657
  %v659 = vpop.f32.mrb[0].mxu0
  %660 = vmatprep.mubr.f32.mxu0 0.0
  %661 = vmatmul.mubr.f32.gmra.mrb[0].mxu0 %v579
  %v662 = vpop.f32.mrb[0].mxu0
  %v663 = vadd.f32 0.0, %v662
  %v664 = vpop.f32.mrb[0].mxu0
  %665 = vdwg.mxu0
  %v666 = vadd.f32 %v558, %v648
  %v667 = vadd.f32 %v559, %v653
  %v668 = vadd.f32 %v560, %v658
  %v669 = vadd.f32 %v561, %v663
  %670 = vst [vmem:[%s7] sm:$0xff] %v666
  %671 = vst [vmem:[%s7 + $0x8] sm:$0xff] %v667
  %672 = vst [vmem:[%s7 + $0x10] sm:$0xff] %v668
  %673 = vst [vmem:[%s7 + $0x18] sm:$0xff] %v669
  %v674 = vmul.f32 %v446, %v486
  %675 = vst [vmem:[%s7 + $0x20] sm:$0xff] %v674
  %v676 = vmul.f32 %v451, %v486
  %677 = vst [vmem:[%s7 + $0x28] sm:$0xff] %v676
  %v678 = vmul.f32 %v456, %v486
  %679 = vst [vmem:[%s7 + $0x30] sm:$0xff] %v678
  // Predicated region
  $region30: #{gvp_graph_embedding_forward.2} parent=0 // pred_check
    _
  $region31: #{gvp_graph_embedding_forward.2} parent=0 // pred_check_branch
    %681 = sbr.rel (0) target = $region33
  $region32: #{gvp_graph_embedding_forward.2} parent=0 // pred_region
    _
  $region33: #{gvp_graph_embedding_forward.2} parent=0 // pred_fallthru
    _
  // Predicated region
  $region34: #{gvp_graph_embedding_forward.2} parent=0 // pred_check
    _
  $region35: #{gvp_graph_embedding_forward.2} parent=0 // pred_check_branch
    %683 = sbr.rel (0) target = $region37
  $region36: #{gvp_graph_embedding_forward.2} parent=0 // pred_region
    _
  $region37: #{gvp_graph_embedding_forward.2} parent=0 // pred_fallthru
    _

// kernel: gvp_graph_embedding_forward.3
$region0: #{gvp_graph_embedding_forward.3}
  #allocation0 [shape = 'u32[]', space=smem, size = 0x4, offset = 0x4, fixed_abs, tag = 'smem constant byte address 0x4 - core index']
  #allocation1 [shape = 'u32[144,128]{1,0:T(1,128)}', space=vmem, size = 0x12000, scoped, tag = 'internal scratch']
  %s0 = inlined_call_operand.vmem [shape: f32[64,128], index: 0, kind: input, shape index: {}]
  %s1 = inlined_call_operand.vmem [shape: f32[24,24], index: 1, kind: input, shape index: {}]
  %s2 = inlined_call_operand.vmem [shape: f32[16,40], index: 2, kind: input, shape index: {}]
  %s3 = inlined_call_operand.vmem [shape: f32[16,8], index: 3, kind: input, shape index: {}]
  %s4 = inlined_call_operand.vmem [shape: f32[24,24], index: 4, kind: input, shape index: {}]
  %s5 = inlined_call_operand.vmem [shape: f32[16,3], index: 5, kind: input, shape index: {}]
  %s6 = inlined_call_operand.vmem [shape: f32[40,128], index: 6, kind: output, shape index: {}]
  %s7 = sld [smem:[#allocation0]]
  $region34: #{gvp_graph_embedding_forward.3} parent=0
    _
  %s9 = ssub.s32 1, %s7
  %s10 = scalar_select 0, %s9, %s7
  // Predicated region
  $region2: #{gvp_graph_embedding_forward.3} parent=0 // pred_check
    _
  $region3: #{gvp_graph_embedding_forward.3} parent=0 // pred_check_branch
    %12 = sbr.rel (0) target = $region5
  $region4: #{gvp_graph_embedding_forward.3} parent=0 // pred_region
    _
  $region5: #{gvp_graph_embedding_forward.3} parent=0 // pred_fallthru
    _
  // Predicated region
  $region6: #{gvp_graph_embedding_forward.3} parent=0 // pred_check
    _
  $region7: #{gvp_graph_embedding_forward.3} parent=0 // pred_check_branch
    %14 = sbr.rel (0) target = $region9
  $region8: #{gvp_graph_embedding_forward.3} parent=0 // pred_region
    _
  $region9: #{gvp_graph_embedding_forward.3} parent=0 // pred_fallthru
    _
  // Predicated region
  $region10: #{gvp_graph_embedding_forward.3} parent=0 // pred_check
    _
  $region11: #{gvp_graph_embedding_forward.3} parent=0 // pred_check_branch
    %16 = sbr.rel (0) target = $region13
  $region12: #{gvp_graph_embedding_forward.3} parent=0 // pred_region
    _
  $region13: #{gvp_graph_embedding_forward.3} parent=0 // pred_fallthru
    _
  // Predicated region
  $region14: #{gvp_graph_embedding_forward.3} parent=0 // pred_check
    _
  $region15: #{gvp_graph_embedding_forward.3} parent=0 // pred_check_branch
    %18 = sbr.rel (0) target = $region17
  $region16: #{gvp_graph_embedding_forward.3} parent=0 // pred_region
    _
  $region17: #{gvp_graph_embedding_forward.3} parent=0 // pred_fallthru
    _
  // Predicated region
  $region18: #{gvp_graph_embedding_forward.3} parent=0 // pred_check
    _
  $region19: #{gvp_graph_embedding_forward.3} parent=0 // pred_check_branch
    %20 = sbr.rel (0) target = $region21
  $region20: #{gvp_graph_embedding_forward.3} parent=0 // pred_region
    _
  $region21: #{gvp_graph_embedding_forward.3} parent=0 // pred_fallthru
    _
  // Predicated region
  $region22: #{gvp_graph_embedding_forward.3} parent=0 // pred_check
    _
  $region23: #{gvp_graph_embedding_forward.3} parent=0 // pred_check_branch
    %22 = sbr.rel (0) target = $region25
  $region24: #{gvp_graph_embedding_forward.3} parent=0 // pred_region
    _
  $region25: #{gvp_graph_embedding_forward.3} parent=0 // pred_fallthru
    _
  %v23 = vld [vmem:[%s0] sm:$0xff]
  %v24 = vld [vmem:[%s0 + $0x8] sm:$0xff]
  %v25 = vld [vmem:[%s0 + $0x10] sm:$0xff]
  %v26 = vld [vmem:[%s0 + $0x18] sm:$0xff]
  %v27 = vld [vmem:[%s0 + $0x20] sm:$0xff]
  %v28 = vld [vmem:[%s0 + $0x28] sm:$0xff]
  %v29 = vld [vmem:[%s0 + $0x30] sm:$0xff]
  %v30 = vld [vmem:[%s0 + $0x38] sm:$0xff]
  %v31 = vld [vmem:[%s1] sm:$0xff]
  %v32 = vld [vmem:[%s1 + $0x8] sm:$0xff]
  %v33 = vld [vmem:[%s1 + $0x10] sm:$0xff]
  %vm34 = vcmask 195584
  %v36 = vsel %vm34, %v31, 0
  %v39 = vsel %vm34, %v32, 0
  %v42 = vsel %vm34, %v33, 0
  %44 = vmatprep.subr.mxu0 0.0
  %45 = vmatpush1.msra.mxu0 %v28
  %46 = vmatprep.subr.mxu0 0.0
  %47 = vmatpush1.msra.mxu0 %v29
  %48 = vmatprep.subr.mxu0 0.0
  %49 = vmatpush1.msra.mxu0 %v30
  %50 = vmatprep.subr.mxu0 0.0
  %51 = vmatpush1.msra.mxu0 0.0
  %52 = vmatprep.subr.mxu0 0.0
  %53 = vmatpush1.msra.mxu0 0.0
  %54 = vmatprep.subr.mxu0 0.0
  %55 = vmatpush1.msra.mxu0 0.0
  %56 = vmatprep.subr.mxu0 0.0
  %57 = vmatpush1.msra.mxu0 0.0
  %58 = vmatprep.subr.mxu0 0.0
  %59 = vmatpush1.msra.mxu0 0.0
  %60 = vmatprep.subr.mxu0 0.0
  %61 = vmatpush1.msra.mxu0 0.0
  %62 = vmatprep.subr.mxu0 0.0
  %63 = vmatpush1.msra.mxu0 0.0
  %64 = vmatprep.subr.mxu0 0.0
  %65 = vmatpush1.msra.mxu0 0.0
  %66 = vmatprep.subr.mxu0 0.0
  %67 = vmatpush1.msra.mxu0 0.0
  %68 = vmatprep.subr.mxu0 0.0
  %69 = vmatpush1.msra.mxu0 0.0
  %70 = vmatprep.subr.mxu0 0.0
  %71 = vmatpush1.msra.mxu0 0.0
  %72 = vmatprep.subr.mxu0 0.0
  %73 = vmatpush1.msra.mxu0 0.0
  %74 = vmatprep.subr.mxu0 0.0
  %75 = vmatpush1.msra.mxu0 0.0
  %76 = vmatprep.subr.mxu0 0.0
  %77 = vmatpush1.msra.mxu0 0.0
  %78 = vmatprep.subr.mxu0 0.0
  %79 = vmatpush1.msra.mxu0 0.0
  %80 = vmatprep.subr.mxu0 0.0
  %81 = vmatpush1.msra.mxu0 0.0
  %82 = vmatprep.subr.mxu0 0.0
  %83 = vmatpush1.msra.mxu0 0.0
  %84 = vmatprep.subr.mxu0 0.0
  %85 = vmatpush1.msra.mxu0 0.0
  %86 = vmatprep.subr.mxu0 0.0
  %87 = vmatpush1.msra.mxu0 0.0
  %88 = vmatprep.subr.mxu0 0.0
  %89 = vmatpush1.msra.mxu0 0.0
  %90 = vmatprep.subr.mxu0 0.0
  %91 = vmatpush1.msra.mxu0 0.0
  %92 = vmatprep.subr.mxu0 0.0
  %93 = vmatpush1.msra.mxu0 0.0
  %94 = vmatprep.subr.mxu0 0.0
  %95 = vmatpush1.msra.mxu0 0.0
  %96 = vmatprep.subr.mxu0 0.0
  %97 = vmatpush1.msra.mxu0 0.0
  %98 = vmatprep.subr.mxu0 0.0
  %99 = vmatpush1.msra.mxu0 0.0
  %100 = vmatprep.subr.mxu0 0.0
  %101 = vmatpush1.msra.mxu0 0.0
  %102 = vmatprep.subr.mxu0 0.0
  %103 = vmatpush1.msra.mxu0 0.0
  %104 = vmatprep.subr.mxu0 0.0
  %105 = vmatpush1.msra.mxu0 0.0
  %106 = vmatprep.subr.mxu0 0.0
  %107 = vmatpush1.msra.mxu0 0.0
  %108 = vmatprep.mubr.f32.mxu0 0.0
  %109 = vmatmul.mubr.f32.gmra.mrb[0].mxu0 %v36
  %v110 = vpop.f32.mrb[0].mxu0
  %v111 = vadd.f32 0.0, %v110
  %v112 = vpop.f32.mrb[0].mxu0
  %113 = vmatprep.mubr.f32.mxu0 0.0
  %114 = vmatmul.mubr.f32.gmra.mrb[0].mxu0 %v39
  %v115 = vpop.f32.mrb[0].mxu0
  %v116 = vadd.f32 0.0, %v115
  %v117 = vpop.f32.mrb[0].mxu0
  %118 = vmatprep.mubr.f32.mxu0 0.0
  %119 = vmatmul.mubr.f32.gmra.mrb[0].mxu0 %v42
  %v120 = vpop.f32.mrb[0].mxu0
  %v121 = vadd.f32 0.0, %v120
  %v122 = vpop.f32.mrb[0].mxu0
  %123 = vdwg.mxu0
  %v124 = vmul.f32 %v111, %v111
  %v125 = vmul.f32 %v116, %v116
  %v126 = vadd.f32 %v124, %v125
  %v127 = vmul.f32 %v121, %v121
  %v128 = vadd.f32 %v126, %v127
  %v129 = vmax.f32 %v128, 1e-08
  %v130 = vrsqrt.pop %v129
  %v131 = vmul.f32 %v129, %v130
  %vm132 = vcmp.eq.f32.partialorder %v129, inf
  %v133 = vsel %vm132, %v129, %v131
  %vm134 = vcmp.eq.f32.partialorder %v129, 0.0
  %v135 = vand.u32 %v129, 2147483648
  %v136 = vsel %vm134, %v135, %v133
  %v137 = vld [vmem:[%s2] sm:$0xff]
  %v138 = vld [vmem:[%s2 + $0x8] sm:$0xff]
  %v139 = vld [vmem:[%s3] sm:$0xff]
  %v140 = vld [vmem:[%s3 + $0x8] sm:$0xff]
  %vm141 = vcmask 64512
  %v143 = vsel %vm141, %v139, 0
  %v146 = vsel %vm141, %v140, 0
  %148 = vmatprep.subr.mxu0 0.0
  %149 = vmatpush1.msra.mxu0 %v136
  %150 = vmatprep.subr.mxu0 0.0
  %151 = vmatpush1.msra.mxu0 0.0
  %152 = vmatprep.subr.mxu0 0.0
  %153 = vmatpush1.msra.mxu0 0.0
  %154 = vmatprep.subr.mxu0 0.0
  %155 = vmatpush1.msra.mxu0 0.0
  %156 = vmatprep.subr.mxu0 0.0
  %157 = vmatpush1.msra.mxu0 0.0
  %158 = vmatprep.subr.mxu0 0.0
  %159 = vmatpush1.msra.mxu0 0.0
  %160 = vmatprep.subr.mxu0 0.0
  %161 = vmatpush1.msra.mxu0 0.0
  %162 = vmatprep.subr.mxu0 0.0
  %163 = vmatpush1.msra.mxu0 0.0
  %164 = vmatprep.subr.mxu0 0.0
  %165 = vmatpush1.msra.mxu0 0.0
  %166 = vmatprep.subr.mxu0 0.0
  %167 = vmatpush1.msra.mxu0 0.0
  %168 = vmatprep.subr.mxu0 0.0
  %169 = vmatpush1.msra.mxu0 0.0
  %170 = vmatprep.subr.mxu0 0.0
  %171 = vmatpush1.msra.mxu0 0.0
  %172 = vmatprep.subr.mxu0 0.0
  %173 = vmatpush1.msra.mxu0 0.0
  %174 = vmatprep.subr.mxu0 0.0
  %175 = vmatpush1.msra.mxu0 0.0
  %176 = vmatprep.subr.mxu0 0.0
  %177 = vmatpush1.msra.mxu0 0.0
  %178 = vmatprep.subr.mxu0 0.0
  %179 = vmatpush1.msra.mxu0 0.0
  %180 = vmatprep.subr.mxu0 0.0
  %181 = vmatpush1.msra.mxu0 0.0
  %182 = vmatprep.subr.mxu0 0.0
  %183 = vmatpush1.msra.mxu0 0.0
  %184 = vmatprep.subr.mxu0 0.0
  %185 = vmatpush1.msra.mxu0 0.0
  %186 = vmatprep.subr.mxu0 0.0
  %187 = vmatpush1.msra.mxu0 0.0
  %188 = vmatprep.subr.mxu0 0.0
  %189 = vmatpush1.msra.mxu0 0.0
  %190 = vmatprep.subr.mxu0 0.0
  %191 = vmatpush1.msra.mxu0 0.0
  %192 = vmatprep.subr.mxu0 0.0
  %193 = vmatpush1.msra.mxu0 0.0
  %194 = vmatprep.subr.mxu0 0.0
  %195 = vmatpush1.msra.mxu0 0.0
  %196 = vmatprep.subr.mxu0 0.0
  %197 = vmatpush1.msra.mxu0 0.0
  %198 = vmatprep.subr.mxu0 0.0
  %199 = vmatpush1.msra.mxu0 0.0
  %200 = vmatprep.subr.mxu0 0.0
  %201 = vmatpush1.msra.mxu0 0.0
  %202 = vmatprep.subr.mxu0 0.0
  %203 = vmatpush1.msra.mxu0 0.0
  %204 = vmatprep.subr.mxu0 0.0
  %205 = vmatpush1.msra.mxu0 0.0
  %206 = vmatprep.subr.mxu0 0.0
  %207 = vmatpush1.msra.mxu0 0.0
  %208 = vmatprep.subr.mxu0 0.0
  %209 = vmatpush1.msra.mxu0 0.0
  %210 = vmatprep.subr.mxu0 0.0
  %211 = vmatpush1.msra.mxu0 0.0
  %212 = vmatprep.mubr.f32.mxu0 0.0
  %213 = vmatmul.mubr.f32.gmra.mrb[0].mxu0 %v143
  %v214 = vpop.f32.mrb[0].mxu0
  %v215 = vadd.f32 0.0, %v214
  %v216 = vpop.f32.mrb[0].mxu0
  %217 = vmatprep.mubr.f32.mxu0 0.0
  %218 = vmatmul.mubr.f32.gmra.mrb[0].mxu0 %v146
  %v219 = vpop.f32.mrb[0].mxu0
  %v220 = vadd.f32 0.0, %v219
  %v221 = vpop.f32.mrb[0].mxu0
  %222 = vdwg.mxu0
  %vm223 = vcmask 326656
  %v225 = vsel %vm223, %v137, 0
  %v228 = vsel %vm223, %v138, 0
  %230 = vmatprep.subr.mxu0 0.0
  %231 = vmatpush1.msra.mxu0 %v23
  %232 = vmatprep.subr.mxu0 0.0
  %233 = vmatpush1.msra.mxu0 %v24
  %234 = vmatprep.subr.mxu0 0.0
  %235 = vmatpush1.msra.mxu0 %v25
  %236 = vmatprep.subr.mxu0 0.0
  %237 = vmatpush1.msra.mxu0 %v26
  %238 = vmatprep.subr.mxu0 0.0
  %239 = vmatpush1.msra.mxu0 %v27
  %240 = vmatprep.subr.mxu0 0.0
  %241 = vmatpush1.msra.mxu0 0.0
  %242 = vmatprep.subr.mxu0 0.0
  %243 = vmatpush1.msra.mxu0 0.0
  %244 = vmatprep.subr.mxu0 0.0
  %245 = vmatpush1.msra.mxu0 0.0
  %246 = vmatprep.subr.mxu0 0.0
  %247 = vmatpush1.msra.mxu0 0.0
  %248 = vmatprep.subr.mxu0 0.0
  %249 = vmatpush1.msra.mxu0 0.0
  %250 = vmatprep.subr.mxu0 0.0
  %251 = vmatpush1.msra.mxu0 0.0
  %252 = vmatprep.subr.mxu0 0.0
  %253 = vmatpush1.msra.mxu0 0.0
  %254 = vmatprep.subr.mxu0 0.0
  %255 = vmatpush1.msra.mxu0 0.0
  %256 = vmatprep.subr.mxu0 0.0
  %257 = vmatpush1.msra.mxu0 0.0
  %258 = vmatprep.subr.mxu0 0.0
  %259 = vmatpush1.msra.mxu0 0.0
  %260 = vmatprep.subr.mxu0 0.0
  %261 = vmatpush1.msra.mxu0 0.0
  %262 = vmatprep.subr.mxu0 0.0
  %263 = vmatpush1.msra.mxu0 0.0
  %264 = vmatprep.subr.mxu0 0.0
  %265 = vmatpush1.msra.mxu0 0.0
  %266 = vmatprep.subr.mxu0 0.0
  %267 = vmatpush1.msra.mxu0 0.0
  %268 = vmatprep.subr.mxu0 0.0
  %269 = vmatpush1.msra.mxu0 0.0
  %270 = vmatprep.subr.mxu0 0.0
  %271 = vmatpush1.msra.mxu0 0.0
  %272 = vmatprep.subr.mxu0 0.0
  %273 = vmatpush1.msra.mxu0 0.0
  %274 = vmatprep.subr.mxu0 0.0
  %275 = vmatpush1.msra.mxu0 0.0
  %276 = vmatprep.subr.mxu0 0.0
  %277 = vmatpush1.msra.mxu0 0.0
  %278 = vmatprep.subr.mxu0 0.0
  %279 = vmatpush1.msra.mxu0 0.0
  %280 = vmatprep.subr.mxu0 0.0
  %281 = vmatpush1.msra.mxu0 0.0
  %282 = vmatprep.subr.mxu0 0.0
  %283 = vmatpush1.msra.mxu0 0.0
  %284 = vmatprep.subr.mxu0 0.0
  %285 = vmatpush1.msra.mxu0 0.0
  %286 = vmatprep.subr.mxu0 0.0
  %287 = vmatpush1.msra.mxu0 0.0
  %288 = vmatprep.subr.mxu0 0.0
  %289 = vmatpush1.msra.mxu0 0.0
  %290 = vmatprep.subr.mxu0 0.0
  %291 = vmatpush1.msra.mxu0 0.0
  %292 = vmatprep.subr.mxu0 0.0
  %293 = vmatpush1.msra.mxu0 0.0
  %294 = vmatprep.mubr.f32.mxu0 0.0
  %295 = vmatmul.mubr.f32.gmra.mrb[0].mxu0 %v225
  %v296 = vpop.f32.mrb[0].mxu0
  %v297 = vadd.f32 %v215, %v296
  %v298 = vpop.f32.mrb[0].mxu0
  %299 = vmatprep.mubr.f32.mxu0 0.0
  %300 = vmatmul.mubr.f32.gmra.mrb[0].mxu0 %v228
  %v301 = vpop.f32.mrb[0].mxu0
  %v302 = vadd.f32 %v220, %v301
  %v303 = vpop.f32.mrb[0].mxu0
  %304 = vdwg.mxu0
  %v305 = vld [vmem:[%s5] sm:$0xff]
  %v306 = vld [vmem:[%s5 + $0x8] sm:$0xff]
  %308 = vset.pattern.permute.xlu0 0
  %309 = vperm.xlu0 %308, %v305
  %v310 = vpop.permute.xlu0 %309
  %313 = vset.pattern.permute.xlu0 0
  %314 = vperm.xlu0 %313, %v306
  %v315 = vpop.permute.xlu0 %314
  %v317 = vadd.f32 %v297, %v310
  %v318 = vadd.f32 %v302, %v315
  %v319 = vld [vmem:[%s4] sm:$0xff]
  %v320 = vld [vmem:[%s4 + $0x8] sm:$0xff]
  %v321 = vld [vmem:[%s4 + $0x10] sm:$0xff]
  %v323 = vsel %vm34, %v319, 0
  %v326 = vsel %vm34, %v320, 0
  %v329 = vsel %vm34, %v321, 0
  %331 = vmatprep.subr.mxu0 0.0
  %332 = vmatpush1.msra.mxu0 %v111
  %333 = vmatprep.subr.mxu0 0.0
  %334 = vmatpush1.msra.mxu0 %v116
  %335 = vmatprep.subr.mxu0 0.0
  %336 = vmatpush1.msra.mxu0 %v121
  %337 = vmatprep.subr.mxu0 0.0
  %338 = vmatpush1.msra.mxu0 0.0
  %339 = vmatprep.subr.mxu0 0.0
  %340 = vmatpush1.msra.mxu0 0.0
  %341 = vmatprep.subr.mxu0 0.0
  %342 = vmatpush1.msra.mxu0 0.0
  %343 = vmatprep.subr.mxu0 0.0
  %344 = vmatpush1.msra.mxu0 0.0
  %345 = vmatprep.subr.mxu0 0.0
  %346 = vmatpush1.msra.mxu0 0.0
  %347 = vmatprep.subr.mxu0 0.0
  %348 = vmatpush1.msra.mxu0 0.0
  %349 = vmatprep.subr.mxu0 0.0
  %350 = vmatpush1.msra.mxu0 0.0
  %351 = vmatprep.subr.mxu0 0.0
  %352 = vmatpush1.msra.mxu0 0.0
  %353 = vmatprep.subr.mxu0 0.0
  %354 = vmatpush1.msra.mxu0 0.0
  %355 = vmatprep.subr.mxu0 0.0
  %356 = vmatpush1.msra.mxu0 0.0
  %357 = vmatprep.subr.mxu0 0.0
  %358 = vmatpush1.msra.mxu0 0.0
  %359 = vmatprep.subr.mxu0 0.0
  %360 = vmatpush1.msra.mxu0 0.0
  %361 = vmatprep.subr.mxu0 0.0
  %362 = vmatpush1.msra.mxu0 0.0
  %363 = vmatprep.subr.mxu0 0.0
  %364 = vmatpush1.msra.mxu0 0.0
  %365 = vmatprep.subr.mxu0 0.0
  %366 = vmatpush1.msra.mxu0 0.0
  %367 = vmatprep.subr.mxu0 0.0
  %368 = vmatpush1.msra.mxu0 0.0
  %369 = vmatprep.subr.mxu0 0.0
  %370 = vmatpush1.msra.mxu0 0.0
  %371 = vmatprep.subr.mxu0 0.0
  %372 = vmatpush1.msra.mxu0 0.0
  %373 = vmatprep.subr.mxu0 0.0
  %374 = vmatpush1.msra.mxu0 0.0
  %375 = vmatprep.subr.mxu0 0.0
  %376 = vmatpush1.msra.mxu0 0.0
  %377 = vmatprep.subr.mxu0 0.0
  %378 = vmatpush1.msra.mxu0 0.0
  %379 = vmatprep.subr.mxu0 0.0
  %380 = vmatpush1.msra.mxu0 0.0
  %381 = vmatprep.subr.mxu0 0.0
  %382 = vmatpush1.msra.mxu0 0.0
  %383 = vmatprep.subr.mxu0 0.0
  %384 = vmatpush1.msra.mxu0 0.0
  %385 = vmatprep.subr.mxu0 0.0
  %386 = vmatpush1.msra.mxu0 0.0
  %387 = vmatprep.subr.mxu0 0.0
  %388 = vmatpush1.msra.mxu0 0.0
  %389 = vmatprep.subr.mxu0 0.0
  %390 = vmatpush1.msra.mxu0 0.0
  %391 = vmatprep.subr.mxu0 0.0
  %392 = vmatpush1.msra.mxu0 0.0
  %393 = vmatprep.subr.mxu0 0.0
  %394 = vmatpush1.msra.mxu0 0.0
  %395 = vmatprep.mubr.f32.mxu0 0.0
  %396 = vmatmul.mubr.f32.gmra.mrb[0].mxu0 %v323
  %v397 = vpop.f32.mrb[0].mxu0
  %v398 = vadd.f32 0.0, %v397
  %v399 = vpop.f32.mrb[0].mxu0
  %400 = vmatprep.mubr.f32.mxu0 0.0
  %401 = vmatmul.mubr.f32.gmra.mrb[0].mxu0 %v326
  %v402 = vpop.f32.mrb[0].mxu0
  %v403 = vadd.f32 0.0, %v402
  %v404 = vpop.f32.mrb[0].mxu0
  %405 = vmatprep.mubr.f32.mxu0 0.0
  %406 = vmatmul.mubr.f32.gmra.mrb[0].mxu0 %v329
  %v407 = vpop.f32.mrb[0].mxu0
  %v408 = vadd.f32 0.0, %v407
  %v409 = vpop.f32.mrb[0].mxu0
  %410 = vdwg.mxu0
  %v411 = vmul.f32 %v398, %v398
  %v412 = vmul.f32 %v403, %v403
  %v413 = vadd.f32 %v411, %v412
  %v414 = vmul.f32 %v408, %v408
  %v415 = vadd.f32 %v413, %v414
  %v416 = vmax.f32 %v415, 0.0001
  %vm417 = vcmp.gt.f32.partialorder %v416, 0.0002
  %v418 = vsel %vm417, 1, 0
  %v419 = vcvt.s32.f32 %v418
  %v420 = vmul.f32 %v416, %v419
  %v421 = vrot.slane %v420, 4
  %v422 = vadd.f32 %v420, %v421
  %v423 = vrot.slane %v422, 2
  %v424 = vadd.f32 %v422, %v423
  %v425 = vrot.slane %v424, 1
  %v426 = vadd.f32 %v424, %v425
  %v427 = vrot.slane %v419, 4
  %v428 = vadd.f32 %v419, %v427
  %v429 = vrot.slane %v428, 2
  %v430 = vadd.f32 %v428, %v429
  %v431 = vrot.slane %v430, 1
  %v432 = vadd.f32 %v430, %v431
  %v433 = vadd.f32 %v432, 0.0001
  %v434 = vrcp.pop %v433
  %v435 = vmul.f32 %v426, %v434
  %v436 = vadd.f32 %v435, 0.0001
  %v437 = vrsqrt.pop %v436
  %v438 = vmul.f32 %v419, %v437
  %v439 = vadd.f32 %v317, %v318
  %v440 = vrot.slane %v439, 4
  %v441 = vadd.f32 %v439, %v440
  %v442 = vrot.slane %v441, 2
  %v443 = vadd.f32 %v441, %v442
  %v444 = vrot.slane %v443, 1
  %v445 = vadd.f32 %v443, %v444
  %v446 = vrcp.pop 16.0
  %v447 = vmul.f32 %v445, %v446
  %v448 = vsub.f32 %v317, %v447
  %v449 = vsub.f32 %v318, %v447
  %v450 = vmul.f32 %v448, %v448
  %v451 = vmul.f32 %v449, %v449
  %v452 = vadd.f32 %v450, %v451
  %v453 = vrot.slane %v452, 4
  %v454 = vadd.f32 %v452, %v453
  %v455 = vrot.slane %v454, 2
  %v456 = vadd.f32 %v454, %v455
  %v457 = vrot.slane %v456, 1
  %v458 = vadd.f32 %v456, %v457
  %v459 = vmul.f32 %v458, %v446
  %v460 = vadd.f32 %v459, 1e-05
  %v461 = vrsqrt.pop %v460
  %v462 = vmul.f32 %v448, %v461
  %v463 = vmul.f32 %v449, %v461
  %464 = vset.pattern.permute.xlu0 1
  %465 = vperm.xlu0 %464, %v305
  %v466 = vpop.permute.xlu0 %465
  %468 = vset.pattern.permute.xlu0 1
  %469 = vperm.xlu0 %468, %v306
  %v470 = vpop.permute.xlu0 %469
  %v472 = vmul.f32 %v462, %v466
  %v473 = vmul.f32 %v463, %v470
  %474 = vset.pattern.permute.xlu0 2
  %475 = vperm.xlu0 %474, %v305
  %v476 = vpop.permute.xlu0 %475
  %478 = vset.pattern.permute.xlu0 2
  %479 = vperm.xlu0 %478, %v306
  %v480 = vpop.permute.xlu0 %479
  %v482 = vadd.f32 %v472, %v476
  %v483 = vadd.f32 %v473, %v480
  %484 = vst [vmem:[%s6] sm:$0xff] %v482
  %485 = vst [vmem:[%s6 + $0x8] sm:$0xff] %v483
  %v486 = vmul.f32 %v398, %v438
  %487 = vst [vmem:[%s6 + $0x10] sm:$0xff] %v486
  %v488 = vmul.f32 %v403, %v438
  %489 = vst [vmem:[%s6 + $0x18] sm:$0xff] %v488
  %v490 = vmul.f32 %v408, %v438
  %491 = vst [vmem:[%s6 + $0x20] sm:$0xff] %v490
  // Predicated region
  $region26: #{gvp_graph_embedding_forward.3} parent=0 // pred_check
    _
  $region27: #{gvp_graph_embedding_forward.3} parent=0 // pred_check_branch
    %493 = sbr.rel (0) target = $region29
  $region28: #{gvp_graph_embedding_forward.3} parent=0 // pred_region
    _
  $region29: #{gvp_graph_embedding_forward.3} parent=0 // pred_fallthru
    _
  // Predicated region
  $region30: #{gvp_graph_embedding_forward.3} parent=0 // pred_check
    _
  $region31: #{gvp_graph_embedding_forward.3} parent=0 // pred_check_branch
    %495 = sbr.rel (0) target = $region33
  $region32: #{gvp_graph_embedding_forward.3} parent=0 // pred_region
    _
  $region33: #{gvp_graph_embedding_forward.3} parent=0 // pred_fallthru
    _

</llo_original>
